<compile_context>
chip_gen: v5e
topology: v5e:2x2
jax: 0.10.0
libtpu: 0.0.40
codegen_flags: <defaults>
</compile_context>

<pallas_src>
import jax
import jax.numpy as jnp
import numpy as np
from jax.experimental import pallas as pl
from jax.experimental.pallas import tpu as pltpu


# --------------------------------------------------------------------------- #
# Kernel: one grid step == one decode step for one batch block.
# --------------------------------------------------------------------------- #
def decoder_att_kernel(enc_ref, h0_ref, c0_ref, emb_ref,
                       we_h_ref, we_e_ref, be_ref,
                       w_ctx_ref, w_emb_ref, w_hid_ref, b_g_ref,
                       wfc_ref, bfc_ref,
                       pred_ref, state_ref,
                       h_sc, c_sc, eenc_sc):
    t = pl.program_id(1)
    H = h0_ref.shape[-1]
    mdt = w_ctx_ref.dtype          # matmul-input dtype (f32 or bf16), static

    # ---- per-batch-block init (first decode step only) ---------------------
    @pl.when(t == 0)
    def _init():
        h_sc[...] = h0_ref[...]
        c_sc[...] = c0_ref[...]
        # Loop-invariant encoder energy projection (+ bias): computed once per
        # sequence / batch block, reused for every decode step from VMEM scratch.
        eenc_sc[...] = (jnp.sum(enc_ref[...] * we_e_ref[...][None, :, :], axis=-1)
                        + be_ref[0])

    hid = h_sc[...]                                        # (nb, H)
    cell = c_sc[...]                                       # (nb, H)
    emb = emb_ref[0]                                       # (nb, E)

    # ---- attention: relu energy -> softmax over source axis -> context -----
    e_hid = jnp.sum(hid * we_h_ref[...], axis=-1, keepdims=True)        # (nb, 1)
    energy = jnp.maximum(eenc_sc[...] + e_hid, 0.0)                     # (nb, S)
    m = jnp.max(energy, axis=-1, keepdims=True)
    p = jnp.exp(energy - m)
    attn = p * pl.reciprocal(jnp.sum(p, axis=-1, keepdims=True), approx=True)

    context = jnp.sum(attn[:, :, None] * enc_ref[...], axis=1)          # (nb, 2H)

    # ---- fused LSTM gates: accumulated MXU dots (no rnn_in concat) ---------
    gates = (jnp.dot(context.astype(mdt), w_ctx_ref[...],
                     preferred_element_type=jnp.float32)
             + jnp.dot(emb.astype(mdt), w_emb_ref[...],
                       preferred_element_type=jnp.float32)
             + jnp.dot(hid.astype(mdt), w_hid_ref[...],
                       preferred_element_type=jnp.float32)
             + b_g_ref[...])                                            # (nb, 4H)

    # Gate columns pre-ordered i|f|o|g: full-width sigmoid + tanh, blended with
    # a lane mask instead of sub-vreg lane slices around each EUP launch.
    lane = jax.lax.broadcasted_iota(jnp.int32, gates.shape, 1)
    acts = jnp.where(lane < 3 * H, jax.nn.sigmoid(gates), jnp.tanh(gates))
    i_g = acts[:, :H]
    f_g = acts[:, H:2 * H]
    o_g = acts[:, 2 * H:3 * H]
    g_g = acts[:, 3 * H:]

    c_new = f_g * cell + i_g * g_g
    h_new = o_g * jnp.tanh(c_new)
    h_sc[...] = h_new
    c_sc[...] = c_new

    # ---- output projection (fc weight zero-padded to 128 lanes at prep) ----
    pred_ref[0] = (jnp.dot(h_new.astype(wfc_ref.dtype), wfc_ref[...],
                           preferred_element_type=jnp.float32)
                   + bfc_ref[...])

    # ---- final hidden/cell written once, at the last decode step -----------
    @pl.when(t == pl.num_programs(1) - 1)
    def _finalize():
        state_ref[0] = h_new
        state_ref[1] = c_new


# --------------------------------------------------------------------------- #
# One-time weight re-layout (per model, hoisted out of any decode loop).
# --------------------------------------------------------------------------- #
def prepare_decoder_params(params, use_bf16_matmul=False):
    H = params["lstm_whh"].shape[0]
    twoH = 2 * H
    O = params["fc_w"].shape[1]
    O_pad = ((O + 127) // 128) * 128          # lane-dense per-step output stores

    we = params["energy_w"]                   # (3H, 1): rows [hid(H) | enc(2H)]
    we_h = we[:H, 0][None, :]                 # (1, H)
    we_e = we[H:, 0][None, :]                 # (1, 2H)

    def reorder_gates(w):                     # PyTorch i|f|g|o -> i|f|o|g
        i = w[..., :H]
        f = w[..., H:2 * H]
        g = w[..., 2 * H:3 * H]
        o = w[..., 3 * H:]
        return jnp.concatenate([i, f, o, g], axis=-1)

    w_ih = reorder_gates(params["lstm_wih"])  # (2H+E, 4H)
    w_hh = reorder_gates(params["lstm_whh"])  # (H, 4H)
    b_g = reorder_gates(params["lstm_b"])     # (1, 4H)

    fc_w = jnp.pad(params["fc_w"], ((0, 0), (0, O_pad - O)))
    fc_b = jnp.pad(params["fc_b"], ((0, 0), (0, O_pad - O)))

    mdt = jnp.bfloat16 if use_bf16_matmul else jnp.float32
    return {
        "embedding": params["embedding"],
        "we_h": we_h.astype(jnp.float32),
        "we_e": we_e.astype(jnp.float32),
        "energy_b": params["energy_b"].reshape(-1)[:1].astype(jnp.float32),  # SMEM
        "w_ctx": w_ih[:twoH].astype(mdt),     # (2H, 4H)
        "w_emb": w_ih[twoH:].astype(mdt),     # (E,  4H)
        "w_hid": w_hh.astype(mdt),            # (H,  4H)
        "b_gates": b_g.astype(jnp.float32),   # (1,  4H)
        "fc_w": fc_w.astype(mdt),             # (H,  O_pad)
        "fc_b": fc_b.astype(jnp.float32),     # (1,  O_pad)
        "out_size": O,
    }


# --------------------------------------------------------------------------- #
# Fused T-step decode: ONE pallas_call, weights/enc resident, h/c in scratch.
# --------------------------------------------------------------------------- #
def decoder_att_decode(tokens, encoder_states, hidden, cell, prepped):
    """tokens: (T, N) int32 (teacher-forced). Returns (preds (T,N,O), hidden, cell)."""
    assert hidden.shape[0] == 1 and cell.shape[0] == 1, "num_layers must be 1"
    T, N = tokens.shape
    S, N2, twoH = encoder_states.shape
    assert N == N2
    H = twoH // 2
    E = prepped["embedding"].shape[1]
    O = prepped["out_size"]
    O_pad = prepped["fc_w"].shape[1]

    # Embedding gather (XLA glue; dropout is eval-mode identity).
    emb_seq = prepped["embedding"][tokens]                      # (T, N, E)
    # One transpose per *sequence* (loop-invariant; amortized by fusing all T
    # decode steps into the single pallas_call below).
    enc_t = jnp.transpose(encoder_states, (1, 0, 2))            # (N, S, 2H)

    h0, c0 = hidden[0], cell[0]                                 # (N, H) each

    nb = 8 if N % 8 == 0 else N                                 # batch block
    grid = (N // nb, T)
    const2 = lambda b, t: (0, 0)

    grid_spec = pltpu.PrefetchScalarGridSpec(
        num_scalar_prefetch=0,
        grid=grid,
        in_specs=[
            # per-batch-block, constant across t -> resident in VMEM for all steps
            pl.BlockSpec((nb, S, twoH), lambda b, t: (b, 0, 0)),   # enc_t
            pl.BlockSpec((nb, H), lambda b, t: (b, 0)),            # h0
            pl.BlockSpec((nb, H), lambda b, t: (b, 0)),            # c0
            # per-step embedded token
            pl.BlockSpec((1, nb, E), lambda b, t: (t, b, 0)),      # emb_seq
            # weights: constant block index -> DMA'd once, stay resident
            pl.BlockSpec((1, H), const2),                          # we_h
            pl.BlockSpec((1, twoH), const2),                       # we_e
            pl.BlockSpec(memory_space=pltpu.MemorySpace.SMEM),     # energy_b (scalar)
            pl.BlockSpec(prepped["w_ctx"].shape, const2),
            pl.BlockSpec(prepped["w_emb"].shape, const2),
            pl.BlockSpec(prepped["w_hid"].shape, const2),
            pl.BlockSpec(prepped["b_gates"].shape, const2),
            pl.BlockSpec(prepped["fc_w"].shape, const2),
            pl.BlockSpec(prepped["fc_b"].shape, const2),
        ],
        out_specs=[
            pl.BlockSpec((1, nb, O_pad), lambda b, t: (t, b, 0)),  # per-step preds
            pl.BlockSpec((2, nb, H), lambda b, t: (0, b, 0)),      # final [h; c]
        ],
        scratch_shapes=[
            pltpu.VMEM((nb, H), jnp.float32),    # h carried across steps
            pltpu.VMEM((nb, H), jnp.float32),    # c carried across steps
            pltpu.VMEM((nb, S), jnp.float32),    # loop-invariant e_enc (+bias)
        ],
    )

    preds_pad, state = pl.pallas_call(
        decoder_att_kernel,
        out_shape=(jax.ShapeDtypeStruct((T, N, O_pad), jnp.float32),
                   jax.ShapeDtypeStruct((2, N, H), jnp.float32)),
        grid_spec=grid_spec,
        compiler_params=pltpu.CompilerParams(
            dimension_semantics=("parallel", "arbitrary")),
    )(enc_t, h0, c0, emb_seq,
      prepped["we_h"], prepped["we_e"], prepped["energy_b"],
      prepped["w_ctx"], prepped["w_emb"], prepped["w_hid"], prepped["b_gates"],
      prepped["fc_w"], prepped["fc_b"])

    preds = preds_pad[:, :, :O]
    return preds, state[0][None], state[1][None]


def decoder_att_forward(x_tokens, encoder_states, hidden, cell, prepped):
    """Mirrors Decoder_att.forward (single decode step)."""
    preds, h_new, c_new = decoder_att_decode(x_tokens[None], encoder_states,
                                             hidden, cell, prepped)
    return preds[0], h_new, c_new


# --------------------------------------------------------------------------- #
# Pure-JAX references.
# --------------------------------------------------------------------------- #
def decoder_att_reference(x_tokens, enc, hidden, cell, params):
    emb = params["embedding"][x_tokens][None]            # (1, N, E)
    S = enc.shape[0]
    H = hidden.shape[-1]
    h_rep = jnp.repeat(hidden, S, axis=0)                # (S, N, H)
    cat = jnp.concatenate([h_rep, enc], axis=2)          # (S, N, 3H)
    energy = jax.nn.relu(cat @ params["energy_w"] + params["energy_b"][0])
    attn = jax.nn.softmax(energy, axis=0)
    ctx = jnp.einsum('snk,snl->knl', attn, enc)          # (1, N, 2H)
    rnn_in = jnp.concatenate([ctx, emb], axis=2)[0]      # (N, 2H+E)
    gates = rnn_in @ params["lstm_wih"] + hidden[0] @ params["lstm_whh"] + params["lstm_b"]
    i = jax.nn.sigmoid(gates[:, :H]); f = jax.nn.sigmoid(gates[:, H:2 * H])
    g = jnp.tanh(gates[:, 2 * H:3 * H]); o = jax.nn.sigmoid(gates[:, 3 * H:])
    c_new = f * cell[0] + i * g
    h_new = o * jnp.tanh(c_new)
    pred = h_new @ params["fc_w"] + params["fc_b"]
    return pred, h_new[None], c_new[None]


def decoder_att_reference_decode(tokens, enc, hidden, cell, params):
    preds = []
    for t in range(tokens.shape[0]):
        p, hidden, cell = decoder_att_reference(tokens[t], enc, hidden, cell, params)
        preds.append(p)
    return jnp.stack(preds), hidden, cell


# --------------------------------------------------------------------------- #
if __name__ == "__main__":
    # Module hyperparameters (num_layers must be 1 for the forward to be valid).
    V, E, H, O = 32, 16, 32, 32          # input_size, embedding, hidden, output
    S, N, T = 8, 16, 4                   # source length, batch, decode steps

    key = jax.random.PRNGKey(0)
    ks = jax.random.split(key, 12)
    params = {
        "embedding": 0.1 * jax.random.normal(ks[0], (V, E), jnp.float32),
        "energy_w":  0.1 * jax.random.normal(ks[1], (3 * H, 1), jnp.float32),
        "energy_b":  0.1 * jax.random.normal(ks[2], (1, 1), jnp.float32),
        "lstm_wih":  0.1 * jax.random.normal(ks[3], (2 * H + E, 4 * H), jnp.float32),
        "lstm_whh":  0.1 * jax.random.normal(ks[4], (H, 4 * H), jnp.float32),
        "lstm_b":    0.1 * jax.random.normal(ks[5], (1, 4 * H), jnp.float32),
        "fc_w":      0.1 * jax.random.normal(ks[6], (H, O), jnp.float32),
        "fc_b":      0.1 * jax.random.normal(ks[7], (1, O), jnp.float32),
    }

    tokens = jax.random.randint(ks[8], (T, N), 0, V, jnp.int32)   # teacher-forced ids
    encoder_states = jax.random.normal(ks[9], (S, N, 2 * H), jnp.float32)
    hidden = jax.random.normal(ks[10], (1, N, H), jnp.float32)
    cell = jax.random.normal(ks[11], (1, N, H), jnp.float32)

    # One-time parameter re-layout (per model, not per step).
    prepped_f32 = prepare_decoder_params(params, use_bf16_matmul=False)

    # --- 1) single decode step == the PyTorch module's forward --------------
    pred1, h1, c1 = decoder_att_forward(tokens[0], encoder_states, hidden, cell,
                                        prepped_f32)
    jax.block_until_ready((pred1, h1, c1))
    pred1_r, h1_r, c1_r = decoder_att_reference(tokens[0], encoder_states,
                                                hidden, cell, params)
    np.testing.assert_allclose(np.asarray(pred1), np.asarray(pred1_r), atol=2e-3, rtol=2e-3)
    np.testing.assert_allclose(np.asarray(h1), np.asarray(h1_r), atol=2e-3, rtol=2e-3)
    np.testing.assert_allclose(np.asarray(c1), np.asarray(c1_r), atol=2e-3, rtol=2e-3)

    # --- 2) fused T-step decode loop (one pallas_call), f32 weights ---------
    preds, h_new, c_new = decoder_att_decode(tokens, encoder_states, hidden, cell,
                                             prepped_f32)
    jax.block_until_ready((preds, h_new, c_new))
    preds_r, h_r, c_r = decoder_att_reference_decode(tokens, encoder_states,
                                                     hidden, cell, params)
    np.testing.assert_allclose(np.asarray(preds), np.asarray(preds_r), atol=5e-3, rtol=5e-3)
    np.testing.assert_allclose(np.asarray(h_new), np.asarray(h_r), atol=5e-3, rtol=5e-3)
    np.testing.assert_allclose(np.asarray(c_new), np.asarray(c_r), atol=5e-3, rtol=5e-3)

    # --- 3) same fused decode with bf16 MXU weights (v6e/v7x lever) ----------
    prepped_bf16 = prepare_decoder_params(params, use_bf16_matmul=True)
    preds_b, h_b, c_b = decoder_att_decode(tokens, encoder_states, hidden, cell,
                                           prepped_bf16)
    jax.block_until_ready((preds_b, h_b, c_b))
    np.testing.assert_allclose(np.asarray(preds_b), np.asarray(preds_r), atol=5e-2, rtol=5e-2)
    np.testing.assert_allclose(np.asarray(h_b), np.asarray(h_r), atol=5e-2, rtol=5e-2)
    np.testing.assert_allclose(np.asarray(c_b), np.asarray(c_r), atol=5e-2, rtol=5e-2)

    print("KERNEL_OK")
</pallas_src>

<mosaic_0001>
module attributes {stable_mosaic.version = 11 : i64} {
  func.func @decoder_att_kernel(%arg0: i32, %arg1: i32, %arg2: memref<8x8x64xf32, #tpu.memory_space<vmem>>, %arg3: memref<8x32xf32, #tpu.memory_space<vmem>>, %arg4: memref<8x32xf32, #tpu.memory_space<vmem>>, %arg5: memref<1x8x16xf32, #tpu.memory_space<vmem>>, %arg6: memref<1x32xf32, #tpu.memory_space<vmem>>, %arg7: memref<1x64xf32, #tpu.memory_space<vmem>>, %arg8: memref<1xf32, #tpu.memory_space<smem>>, %arg9: memref<64x128xf32, #tpu.memory_space<vmem>>, %arg10: memref<16x128xf32, #tpu.memory_space<vmem>>, %arg11: memref<32x128xf32, #tpu.memory_space<vmem>>, %arg12: memref<1x128xf32, #tpu.memory_space<vmem>>, %arg13: memref<32x128xf32, #tpu.memory_space<vmem>>, %arg14: memref<1x128xf32, #tpu.memory_space<vmem>>, %arg15: memref<1x8x128xf32, #tpu.memory_space<vmem>>, %arg16: memref<2x8x32xf32, #tpu.memory_space<vmem>>, %arg17: memref<8x32xf32, #tpu.memory_space<vmem>>, %arg18: memref<8x32xf32, #tpu.memory_space<vmem>>, %arg19: memref<8x8xf32, #tpu.memory_space<vmem>>) attributes {dimension_semantics = [#tpu.dimension_semantics<parallel>, #tpu.dimension_semantics<arbitrary>], iteration_bounds = array<i64: 2, 1>, scalar_prefetch = 0 : i64, scratch_operands = 3 : i64, tpu.core_type = #tpu.core_type<tc>, window_params = [{transform_indices = @transform_0, window_bounds = array<i64: 8, 8, 64>}, {transform_indices = @transform_1, window_bounds = array<i64: 8, 32>}, {transform_indices = @transform_2, window_bounds = array<i64: 8, 32>}, {transform_indices = @transform_3, window_bounds = array<i64: 1, 8, 16>}, {pipeline_mode = #tpu.pipeline_mode<synchronous>, transform_indices = @transform_4, window_bounds = array<i64: 1, 32>}, {pipeline_mode = #tpu.pipeline_mode<synchronous>, transform_indices = @transform_5, window_bounds = array<i64: 1, 64>}, {transform_indices = @transform_6, window_bounds = array<i64: 1>}, {pipeline_mode = #tpu.pipeline_mode<synchronous>, transform_indices = @transform_7, window_bounds = array<i64: 64, 128>}, {pipeline_mode = #tpu.pipeline_mode<synchronous>, transform_indices = @transform_8, window_bounds = array<i64: 16, 128>}, {pipeline_mode = #tpu.pipeline_mode<synchronous>, transform_indices = @transform_9, window_bounds = array<i64: 32, 128>}, {pipeline_mode = #tpu.pipeline_mode<synchronous>, transform_indices = @transform_10, window_bounds = array<i64: 1, 128>}, {pipeline_mode = #tpu.pipeline_mode<synchronous>, transform_indices = @transform_11, window_bounds = array<i64: 32, 128>}, {pipeline_mode = #tpu.pipeline_mode<synchronous>, transform_indices = @transform_12, window_bounds = array<i64: 1, 128>}, {transform_indices = @transform_13, window_bounds = array<i64: 1, 8, 128>}, {transform_indices = @transform_14, window_bounds = array<i64: 2, 8, 32>}]} {
    %c0_i32 = arith.constant 0 : i32
    %0 = arith.cmpi eq, %arg1, %c0_i32 : i32
    %1 = arith.extui %0 : i1 to i32
    %c0_i32_0 = arith.constant 0 : i32
    %2 = arith.cmpi ne, %1, %c0_i32_0 : i32
    scf.if %2 {
      %c0_44 = arith.constant 0 : index
      %c0_45 = arith.constant 0 : index
      %75 = vector.load %arg3[%c0_44, %c0_45] : memref<8x32xf32, #tpu.memory_space<vmem>>, vector<8x32xf32>
      %c0_46 = arith.constant 0 : index
      %c0_47 = arith.constant 0 : index
      %76 = vector.load %arg17[%c0_46, %c0_47] : memref<8x32xf32, #tpu.memory_space<vmem>>, vector<8x32xf32>
      tpu.vector_store %arg17[%c0_46, %c0_47], %75 {strides = array<i32>} : memref<8x32xf32, #tpu.memory_space<vmem>>, vector<8x32xf32>,
      %c0_48 = arith.constant 0 : index
      %c0_49 = arith.constant 0 : index
      %77 = vector.load %arg4[%c0_48, %c0_49] : memref<8x32xf32, #tpu.memory_space<vmem>>, vector<8x32xf32>
      %c0_50 = arith.constant 0 : index
      %c0_51 = arith.constant 0 : index
      %78 = vector.load %arg18[%c0_50, %c0_51] : memref<8x32xf32, #tpu.memory_space<vmem>>, vector<8x32xf32>
      tpu.vector_store %arg18[%c0_50, %c0_51], %77 {strides = array<i32>} : memref<8x32xf32, #tpu.memory_space<vmem>>, vector<8x32xf32>,
      %c0_52 = arith.constant 0 : index
      %c0_53 = arith.constant 0 : index
      %c0_54 = arith.constant 0 : index
      %79 = vector.load %arg2[%c0_52, %c0_53, %c0_54] : memref<8x8x64xf32, #tpu.memory_space<vmem>>, vector<8x8x64xf32>
      %c0_55 = arith.constant 0 : index
      %c0_56 = arith.constant 0 : index
      %80 = vector.load %arg7[%c0_55, %c0_56] : memref<1x64xf32, #tpu.memory_space<vmem>>, vector<1x64xf32>
      %81 = vector.shape_cast %80 : vector<1x64xf32> to vector<1x1x64xf32>
      %82 = vector.broadcast %81 : vector<1x1x64xf32> to vector<8x8x64xf32>
      %83 = arith.mulf %79, %82 : vector<8x8x64xf32>
      %cst_57 = arith.constant dense<0.000000e+00> : vector<8x8xf32>
      %84 = vector.multi_reduction <add>, %83, %cst_57 [2] : vector<8x8x64xf32> to vector<8x8xf32>
      %c0_58 = arith.constant 0 : index
      %85 = memref.load %arg8[%c0_58] : memref<1xf32, #tpu.memory_space<smem>>
      %86 = vector.broadcast %85 : f32 to vector<8x8xf32>
      %87 = arith.addf %84, %86 : vector<8x8xf32>
      %c0_59 = arith.constant 0 : index
      %c0_60 = arith.constant 0 : index
      %88 = vector.load %arg19[%c0_59, %c0_60] : memref<8x8xf32, #tpu.memory_space<vmem>>, vector<8x8xf32>
      tpu.vector_store %arg19[%c0_59, %c0_60], %87 {strides = array<i32>} : memref<8x8xf32, #tpu.memory_space<vmem>>, vector<8x8xf32>,
    } else {
    }
    %c0 = arith.constant 0 : index
    %c0_1 = arith.constant 0 : index
    %3 = vector.load %arg17[%c0, %c0_1] : memref<8x32xf32, #tpu.memory_space<vmem>>, vector<8x32xf32>
    %c0_2 = arith.constant 0 : index
    %c0_3 = arith.constant 0 : index
    %4 = vector.load %arg18[%c0_2, %c0_3] : memref<8x32xf32, #tpu.memory_space<vmem>>, vector<8x32xf32>
    %c0_4 = arith.constant 0 : index
    %c0_5 = arith.constant 0 : index
    %c0_6 = arith.constant 0 : index
    %5 = vector.load %arg5[%c0_4, %c0_5, %c0_6] : memref<1x8x16xf32, #tpu.memory_space<vmem>>, vector<1x8x16xf32>
    %6 = vector.shape_cast %5 : vector<1x8x16xf32> to vector<8x16xf32>
    %c0_7 = arith.constant 0 : index
    %c0_8 = arith.constant 0 : index
    %7 = vector.load %arg6[%c0_7, %c0_8] : memref<1x32xf32, #tpu.memory_space<vmem>>, vector<1x32xf32>
    %8 = vector.broadcast %7 : vector<1x32xf32> to vector<8x32xf32>
    %9 = arith.mulf %3, %8 : vector<8x32xf32>
    %cst = arith.constant dense<0.000000e+00> : vector<8xf32>
    %10 = vector.multi_reduction <add>, %9, %cst [1] : vector<8x32xf32> to vector<8xf32>
    %11 = vector.shape_cast %10 : vector<8xf32> to vector<8x1xf32>
    %c0_9 = arith.constant 0 : index
    %c0_10 = arith.constant 0 : index
    %12 = vector.load %arg19[%c0_9, %c0_10] : memref<8x8xf32, #tpu.memory_space<vmem>>, vector<8x8xf32>
    %13 = vector.broadcast %11 : vector<8x1xf32> to vector<8x8xf32>
    %14 = arith.addf %12, %13 : vector<8x8xf32>
    %cst_11 = arith.constant 0.000000e+00 : f32
    %15 = vector.broadcast %cst_11 : f32 to vector<8x8xf32>
    %16 = arith.maximumf %14, %15 : vector<8x8xf32>
    %cst_12 = arith.constant dense<0xFF800000> : vector<8xf32>
    %17 = vector.multi_reduction <maximumf>, %16, %cst_12 [1] : vector<8x8xf32> to vector<8xf32>
    %18 = vector.shape_cast %17 : vector<8xf32> to vector<8x1xf32>
    %19 = vector.broadcast %18 : vector<8x1xf32> to vector<8x8xf32>
    %20 = arith.subf %16, %19 : vector<8x8xf32>
    %21 = math.exp %20 : vector<8x8xf32>
    %cst_13 = arith.constant dense<0.000000e+00> : vector<8xf32>
    %22 = vector.multi_reduction <add>, %21, %cst_13 [1] : vector<8x8xf32> to vector<8xf32>
    %23 = vector.shape_cast %22 : vector<8xf32> to vector<8x1xf32>
    %24 = tpu.reciprocal %23 {approx = true} : vector<8x1xf32> -> vector<8x1xf32>
    %25 = vector.broadcast %24 : vector<8x1xf32> to vector<8x8xf32>
    %26 = arith.mulf %21, %25 : vector<8x8xf32>
    %27 = vector.shape_cast %26 : vector<8x8xf32> to vector<8x8x1xf32>
    %c0_14 = arith.constant 0 : index
    %c0_15 = arith.constant 0 : index
    %c0_16 = arith.constant 0 : index
    %28 = vector.load %arg2[%c0_14, %c0_15, %c0_16] : memref<8x8x64xf32, #tpu.memory_space<vmem>>, vector<8x8x64xf32>
    %29 = vector.broadcast %27 : vector<8x8x1xf32> to vector<8x8x64xf32>
    %30 = arith.mulf %29, %28 : vector<8x8x64xf32>
    %cst_17 = arith.constant dense<0.000000e+00> : vector<8x64xf32>
    %31 = vector.multi_reduction <add>, %30, %cst_17 [1] : vector<8x8x64xf32> to vector<8x64xf32>
    %c0_18 = arith.constant 0 : index
    %c0_19 = arith.constant 0 : index
    %32 = vector.load %arg9[%c0_18, %c0_19] : memref<64x128xf32, #tpu.memory_space<vmem>>, vector<64x128xf32>
    %cst_20 = arith.constant dense<0.000000e+00> : vector<8x128xf32>
    %33 = tpu.matmul %31, %32, %cst_20 {dimension_numbers = #tpu.dot_dimension_numbers<[1], [0], [0], [1], [0, 0, 1, 1], [], []>} : vector<8x64xf32>, vector<64x128xf32>, vector<8x128xf32> -> vector<8x128xf32>
    %c0_21 = arith.constant 0 : index
    %c0_22 = arith.constant 0 : index
    %34 = vector.load %arg10[%c0_21, %c0_22] : memref<16x128xf32, #tpu.memory_space<vmem>>, vector<16x128xf32>
    %cst_23 = arith.constant dense<0.000000e+00> : vector<8x128xf32>
    %35 = tpu.matmul %6, %34, %cst_23 {dimension_numbers = #tpu.dot_dimension_numbers<[1], [0], [0], [1], [0, 0, 1, 1], [], []>} : vector<8x16xf32>, vector<16x128xf32>, vector<8x128xf32> -> vector<8x128xf32>
    %36 = arith.addf %33, %35 : vector<8x128xf32>
    %c0_24 = arith.constant 0 : index
    %c0_25 = arith.constant 0 : index
    %37 = vector.load %arg11[%c0_24, %c0_25] : memref<32x128xf32, #tpu.memory_space<vmem>>, vector<32x128xf32>
    %cst_26 = arith.constant dense<0.000000e+00> : vector<8x128xf32>
    %38 = tpu.matmul %3, %37, %cst_26 {dimension_numbers = #tpu.dot_dimension_numbers<[1], [0], [0], [1], [0, 0, 1, 1], [], []>} : vector<8x32xf32>, vector<32x128xf32>, vector<8x128xf32> -> vector<8x128xf32>
    %39 = arith.addf %36, %38 : vector<8x128xf32>
    %c0_27 = arith.constant 0 : index
    %c0_28 = arith.constant 0 : index
    %40 = vector.load %arg12[%c0_27, %c0_28] : memref<1x128xf32, #tpu.memory_space<vmem>>, vector<1x128xf32>
    %41 = vector.broadcast %40 : vector<1x128xf32> to vector<8x128xf32>
    %42 = arith.addf %39, %41 : vector<8x128xf32>
    %43 = tpu.iota {dimensions = array<i32: 1>} : vector<8x128xi32>
    %c96_i32 = arith.constant 96 : i32
    %44 = vector.broadcast %c96_i32 : i32 to vector<8x128xi32>
    %45 = arith.cmpi slt, %43, %44 : vector<8x128xi32>
    %46 = arith.negf %42 : vector<8x128xf32>
    %47 = math.exp %46 : vector<8x128xf32>
    %cst_29 = arith.constant 1.000000e+00 : f32
    %48 = vector.broadcast %cst_29 : f32 to vector<8x128xf32>
    %49 = arith.addf %48, %47 : vector<8x128xf32>
    %50 = arith.divf %48, %49 : vector<8x128xf32>
    %51 = math.tanh %42 : vector<8x128xf32>
    %52 = arith.select %45, %50, %51 : vector<8x128xi1>, vector<8x128xf32>
    %53 = vector.extract_strided_slice %52 {offsets = [0, 0], sizes = [8, 32], strides = [1, 1]} : vector<8x128xf32> to vector<8x32xf32>
    %54 = vector.extract_strided_slice %52 {offsets = [0, 32], sizes = [8, 32], strides = [1, 1]} : vector<8x128xf32> to vector<8x32xf32>
    %55 = vector.extract_strided_slice %52 {offsets = [0, 64], sizes = [8, 32], strides = [1, 1]} : vector<8x128xf32> to vector<8x32xf32>
    %56 = vector.extract_strided_slice %52 {offsets = [0, 96], sizes = [8, 32], strides = [1, 1]} : vector<8x128xf32> to vector<8x32xf32>
    %57 = arith.mulf %54, %4 : vector<8x32xf32>
    %58 = arith.mulf %53, %56 : vector<8x32xf32>
    %59 = arith.addf %57, %58 : vector<8x32xf32>
    %60 = math.tanh %59 : vector<8x32xf32>
    %61 = arith.mulf %55, %60 : vector<8x32xf32>
    %c0_30 = arith.constant 0 : index
    %c0_31 = arith.constant 0 : index
    %62 = vector.load %arg17[%c0_30, %c0_31] : memref<8x32xf32, #tpu.memory_space<vmem>>, vector<8x32xf32>
    tpu.vector_store %arg17[%c0_30, %c0_31], %61 {strides = array<i32>} : memref<8x32xf32, #tpu.memory_space<vmem>>, vector<8x32xf32>,
    %c0_32 = arith.constant 0 : index
    %c0_33 = arith.constant 0 : index
    %63 = vector.load %arg18[%c0_32, %c0_33] : memref<8x32xf32, #tpu.memory_space<vmem>>, vector<8x32xf32>
    tpu.vector_store %arg18[%c0_32, %c0_33], %59 {strides = array<i32>} : memref<8x32xf32, #tpu.memory_space<vmem>>, vector<8x32xf32>,
    %c0_34 = arith.constant 0 : index
    %c0_35 = arith.constant 0 : index
    %64 = vector.load %arg13[%c0_34, %c0_35] : memref<32x128xf32, #tpu.memory_space<vmem>>, vector<32x128xf32>
    %cst_36 = arith.constant dense<0.000000e+00> : vector<8x128xf32>
    %65 = tpu.matmul %61, %64, %cst_36 {dimension_numbers = #tpu.dot_dimension_numbers<[1], [0], [0], [1], [0, 0, 1, 1], [], []>} : vector<8x32xf32>, vector<32x128xf32>, vector<8x128xf32> -> vector<8x128xf32>
    %c0_37 = arith.constant 0 : index
    %c0_38 = arith.constant 0 : index
    %66 = vector.load %arg14[%c0_37, %c0_38] : memref<1x128xf32, #tpu.memory_space<vmem>>, vector<1x128xf32>
    %67 = vector.broadcast %66 : vector<1x128xf32> to vector<8x128xf32>
    %68 = arith.addf %65, %67 : vector<8x128xf32>
    %c0_39 = arith.constant 0 : index
    %c0_40 = arith.constant 0 : index
    %c0_41 = arith.constant 0 : index
    %69 = vector.load %arg15[%c0_39, %c0_40, %c0_41] : memref<1x8x128xf32, #tpu.memory_space<vmem>>, vector<1x8x128xf32>
    %70 = vector.shape_cast %69 : vector<1x8x128xf32> to vector<8x128xf32>
    %71 = vector.shape_cast %68 : vector<8x128xf32> to vector<1x8x128xf32>
    tpu.vector_store %arg15[%c0_39, %c0_40, %c0_41], %71 {strides = array<i32>} : memref<1x8x128xf32, #tpu.memory_space<vmem>>, vector<1x8x128xf32>,
    %c0_i32_42 = arith.constant 0 : i32
    %72 = arith.cmpi eq, %arg1, %c0_i32_42 : i32
    %73 = arith.extui %72 : i1 to i32
    %c0_i32_43 = arith.constant 0 : i32
    %74 = arith.cmpi ne, %73, %c0_i32_43 : i32
    scf.if %74 {
      %c0_44 = arith.constant 0 : index
      %c0_45 = arith.constant 0 : index
      %c0_46 = arith.constant 0 : index
      %75 = vector.load %arg16[%c0_44, %c0_45, %c0_46] : memref<2x8x32xf32, #tpu.memory_space<vmem>>, vector<1x8x32xf32>
      %76 = vector.shape_cast %75 : vector<1x8x32xf32> to vector<8x32xf32>
      %77 = vector.shape_cast %61 : vector<8x32xf32> to vector<1x8x32xf32>
      tpu.vector_store %arg16[%c0_44, %c0_45, %c0_46], %77 {strides = array<i32>} : memref<2x8x32xf32, #tpu.memory_space<vmem>>, vector<1x8x32xf32>,
      %c1 = arith.constant 1 : index
      %c0_47 = arith.constant 0 : index
      %c0_48 = arith.constant 0 : index
      %78 = vector.load %arg16[%c1, %c0_47, %c0_48] : memref<2x8x32xf32, #tpu.memory_space<vmem>>, vector<1x8x32xf32>
      %79 = vector.shape_cast %78 : vector<1x8x32xf32> to vector<8x32xf32>
      %80 = vector.shape_cast %59 : vector<8x32xf32> to vector<1x8x32xf32>
      tpu.vector_store %arg16[%c1, %c0_47, %c0_48], %80 {strides = array<i32>} : memref<2x8x32xf32, #tpu.memory_space<vmem>>, vector<1x8x32xf32>,
    } else {
    }
    return
  }
  func.func @transform_0(%arg0: i32, %arg1: i32) -> (i32, i32, i32) {
    %c0_i32 = arith.constant 0 : i32
    %c0_i32_0 = arith.constant 0 : i32
    %c0_i32_1 = arith.constant 0 : i32
    return %arg0, %c0_i32, %c0_i32_0 : i32, i32, i32
  }
  func.func @transform_1(%arg0: i32, %arg1: i32) -> (i32, i32) {
    %c0_i32 = arith.constant 0 : i32
    %c0_i32_0 = arith.constant 0 : i32
    return %arg0, %c0_i32 : i32, i32
  }
  func.func @transform_2(%arg0: i32, %arg1: i32) -> (i32, i32) {
    %c0_i32 = arith.constant 0 : i32
    %c0_i32_0 = arith.constant 0 : i32
    return %arg0, %c0_i32 : i32, i32
  }
  func.func @transform_3(%arg0: i32, %arg1: i32) -> (i32, i32, i32) {
    %c0_i32 = arith.constant 0 : i32
    %c0_i32_0 = arith.constant 0 : i32
    return %arg1, %arg0, %c0_i32 : i32, i32, i32
  }
  func.func @transform_4(%arg0: i32, %arg1: i32) -> (i32, i32) {
    %c0_i32 = arith.constant 0 : i32
    %c0_i32_0 = arith.constant 0 : i32
    %c0_i32_1 = arith.constant 0 : i32
    return %c0_i32, %c0_i32_0 : i32, i32
  }
  func.func @transform_5(%arg0: i32, %arg1: i32) -> (i32, i32) {
    %c0_i32 = arith.constant 0 : i32
    %c0_i32_0 = arith.constant 0 : i32
    %c0_i32_1 = arith.constant 0 : i32
    return %c0_i32, %c0_i32_0 : i32, i32
  }
  func.func @transform_6(%arg0: i32, %arg1: i32) -> i32 {
    %c0_i32 = arith.constant 0 : i32
    %c0_i32_0 = arith.constant 0 : i32
    return %c0_i32 : i32
  }
  func.func @transform_7(%arg0: i32, %arg1: i32) -> (i32, i32) {
    %c0_i32 = arith.constant 0 : i32
    %c0_i32_0 = arith.constant 0 : i32
    %c0_i32_1 = arith.constant 0 : i32
    return %c0_i32, %c0_i32_0 : i32, i32
  }
  func.func @transform_8(%arg0: i32, %arg1: i32) -> (i32, i32) {
    %c0_i32 = arith.constant 0 : i32
    %c0_i32_0 = arith.constant 0 : i32
    %c0_i32_1 = arith.constant 0 : i32
    return %c0_i32, %c0_i32_0 : i32, i32
  }
  func.func @transform_9(%arg0: i32, %arg1: i32) -> (i32, i32) {
    %c0_i32 = arith.constant 0 : i32
    %c0_i32_0 = arith.constant 0 : i32
    %c0_i32_1 = arith.constant 0 : i32
    return %c0_i32, %c0_i32_0 : i32, i32
  }
  func.func @transform_10(%arg0: i32, %arg1: i32) -> (i32, i32) {
    %c0_i32 = arith.constant 0 : i32
    %c0_i32_0 = arith.constant 0 : i32
    %c0_i32_1 = arith.constant 0 : i32
    return %c0_i32, %c0_i32_0 : i32, i32
  }
  func.func @transform_11(%arg0: i32, %arg1: i32) -> (i32, i32) {
    %c0_i32 = arith.constant 0 : i32
    %c0_i32_0 = arith.constant 0 : i32
    %c0_i32_1 = arith.constant 0 : i32
    return %c0_i32, %c0_i32_0 : i32, i32
  }
  func.func @transform_12(%arg0: i32, %arg1: i32) -> (i32, i32) {
    %c0_i32 = arith.constant 0 : i32
    %c0_i32_0 = arith.constant 0 : i32
    %c0_i32_1 = arith.constant 0 : i32
    return %c0_i32, %c0_i32_0 : i32, i32
  }
  func.func @transform_13(%arg0: i32, %arg1: i32) -> (i32, i32, i32) {
    %c0_i32 = arith.constant 0 : i32
    %c0_i32_0 = arith.constant 0 : i32
    return %arg1, %arg0, %c0_i32 : i32, i32, i32
  }
  func.func @transform_14(%arg0: i32, %arg1: i32) -> (i32, i32, i32) {
    %c0_i32 = arith.constant 0 : i32
    %c0_i32_0 = arith.constant 0 : i32
    %c0_i32_1 = arith.constant 0 : i32
    return %c0_i32, %arg0, %c0_i32_0 : i32, i32, i32
  }
}

</mosaic_0001>

<llo_original>
// kernel: tpu_custom_call.1
$region0: #{tpu_custom_call.1}
  #allocation0 [shape = 'u32[]', space=smem, size = 0x4, offset = 0x4, fixed_abs, tag = 'smem constant byte address 0x4 - core index']
  #allocation1 [shape = 'u32[72,128]{1,0:T(1,128)}', space=vmem, size = 0x9000, scoped, tag = 'internal scratch']
  #allocation2 [shape = 'f32[8,32]{1,0:T(8,128)}', space=vmem, size = 0x1000, scoped, tag = 'scratch operand']
  #allocation3 [shape = 'f32[8,32]{1,0:T(8,128)}', space=vmem, size = 0x1000, scoped, tag = 'scratch operand']
  #allocation4 [shape = 'f32[8,8]{1,0:T(8,128)}', space=vmem, size = 0x1000, scoped, tag = 'scratch operand']
  #allocation5 [shape = 'f32[1]{0:T(128)S(6)}', space=smem, size = 0x200, scoped, tag = 'scoped memory for tpu_custom_call.1']
  %s0 = inlined_call_operand.hbm [shape: f32[16,8,64], index: 0, kind: input, shape index: {}]
  %s1 = inlined_call_operand.hbm [shape: f32[16,32], index: 1, kind: input, shape index: {}]
  %s2 = inlined_call_operand.hbm [shape: f32[16,32], index: 2, kind: input, shape index: {}]
  %s3 = inlined_call_operand.hbm [shape: f32[1,16,16], index: 3, kind: input, shape index: {}]
  %s4 = inlined_call_operand.vmem [shape: f32[1,32], index: 4, kind: input, shape index: {}]
  %s5 = inlined_call_operand.vmem [shape: f32[1,64], index: 5, kind: input, shape index: {}]
  %s6 = inlined_call_operand.<no memory space> [shape: f32[1], index: 6, kind: input, shape index: {}]
  %s7 = inlined_call_operand.hbm [shape: f32[64,128], index: 7, kind: input, shape index: {}]
  %s8 = inlined_call_operand.hbm [shape: f32[16,128], index: 8, kind: input, shape index: {}]
  %s9 = inlined_call_operand.hbm [shape: f32[32,128], index: 9, kind: input, shape index: {}]
  %s10 = inlined_call_operand.vmem [shape: f32[1,128], index: 10, kind: input, shape index: {}]
  %s11 = inlined_call_operand.hbm [shape: f32[32,128], index: 11, kind: input, shape index: {}]
  %s12 = inlined_call_operand.vmem [shape: f32[1,128], index: 12, kind: input, shape index: {}]
  %s13 = inlined_call_operand.hbm [shape: f32[1,16,128], index: 13, kind: output, shape index: {0}]
  %s14 = inlined_call_operand.hbm [shape: f32[2,16,32], index: 14, kind: output, shape index: {1}]
  %15 = xla_tuple %s13, %s14
  %s16 = sld [smem:[#allocation0]]
  $region133: #{tpu_custom_call.1} parent=0
    _
  %s18 = ssub.s32 1, %s16
  %s19 = scalar_select 0, %s18, %s16
  %20 = sst [smem:[#allocation5]] %s6
  $region1: #{tpu_custom_call.1} parent=0
    #allocation6 [shape = 'u8[65536]{0}', space=vmem, size = 0x10000, scoped, tag = 'input window, operand 0']
    #allocation7 [shape = 's32[2]{0}', space=sflag, size = 0x8, scoped, tag = 'scoped memory for tpu_custom_call.1']
    #allocation8 [shape = 's32[2]{0}', space=sflag, size = 0x8, scoped, tag = 'scoped memory for tpu_custom_call.1']
    #allocation9 [shape = 'u8[8192]{0}', space=vmem, size = 0x2000, scoped, tag = 'input window, operand 1']
    #allocation10 [shape = 's32[2]{0}', space=sflag, size = 0x8, scoped, tag = 'scoped memory for tpu_custom_call.1']
    #allocation11 [shape = 'u8[8192]{0}', space=vmem, size = 0x2000, scoped, tag = 'input window, operand 2']
    #allocation12 [shape = 'u8[8192]{0}', space=vmem, size = 0x2000, scoped, tag = 'input window, operand 3']
    #allocation13 [shape = 's32[2]{0}', space=sflag, size = 0x8, scoped, tag = 'scoped memory for tpu_custom_call.1']
    #allocation14 [shape = 'u8[32768]{0}', space=vmem, size = 0x8000, scoped, tag = 'input window, operand 7, single buffered']
    #allocation15 [shape = 'u8[8192]{0}', space=vmem, size = 0x2000, scoped, tag = 'input window, operand 8, single buffered']
    #allocation16 [shape = 's32[1]{0}', space=sflag, size = 0x4, scoped, tag = 'scoped memory for tpu_custom_call.1']
    #allocation17 [shape = 'u8[16384]{0}', space=vmem, size = 0x4000, scoped, tag = 'input window, operand 9, single buffered']
    #allocation18 [shape = 'u8[16384]{0}', space=vmem, size = 0x4000, scoped, tag = 'input window, operand 11, single buffered']
    #allocation19 [shape = 's32[1]{0}', space=sflag, size = 0x4, scoped, tag = 'scoped memory for tpu_custom_call.1']
    #allocation20 [shape = 'u8[8192]{0}', space=vmem, size = 0x2000, scoped, tag = 'output window, operand 0']
    #allocation21 [shape = 'u8[16384]{0}', space=vmem, size = 0x4000, scoped, tag = 'output window, operand 1']
    #allocation22 [shape = 's32[2]{0}', space=sflag, size = 0x8, scoped, tag = 'scoped memory for tpu_custom_call.1']
    %21 = vsyncpa [#allocation7], 0
    %s22 = scalar_lea.sflag [#allocation7], 1
    %23 = vsyncpa %s22, 0
    %24 = vsyncpa [#allocation10], 0
    %s25 = scalar_lea.sflag [#allocation10], 1
    %26 = vsyncpa %s25, 0
    %27 = vsyncpa [#allocation13], 0
    %s28 = scalar_lea.sflag [#allocation13], 1
    %29 = vsyncpa %s28, 0
    %30 = vsyncpa [#allocation16], 0
    %31 = vsyncpa [#allocation19], 0
    %32 = vsyncpa [#allocation8], 0
    %s33 = scalar_lea.sflag [#allocation8], 1
    %34 = vsyncpa %s33, 0
    %35 = vsyncpa [#allocation22], 0
    %s36 = scalar_lea.sflag [#allocation22], 1
    %37 = vsyncpa %s36, 0
    loop: start=0, step=1, limit=4
    $region2: #{tpu_custom_call.1} parent=1 // loop_pre_header
      _
    $region3: #{tpu_custom_call.1} parent=1 // loop_header
      %s39 = sphi 0, %s43
      %p40 = scmp.ge.s32.totalorder %s39, 4
      %s46 = sphi 0, %s58
      %s47 = sphi 0, %s54
      %s48 = sphi 0, %s46
      %s49 = sphi 0, %s47
      %s50 = sphi 0, %s48
      %s51 = sphi 0, %s49
      %s61 = sphi 0, %s63
      %s64 = sphi 0, %s61
      %s65 = sphi 0, %s64
      %s81 = sphi 0, %s65
      %s87 = sphi 0, %s89
      %s90 = sphi 0, %s87
      %s91 = sphi 0, %s90
      %s107 = sphi 0, %s91
      %s113 = sphi 0, %s115
      %s116 = sphi 0, %s113
      %s117 = sphi 0, %s116
      %s133 = sphi 0, %s117
      %s141 = sphi 0, %s143
      %s144 = sphi 0, %s141
      %s145 = sphi 0, %s144
      %s161 = sphi 0, %s145
      %s165 = sphi 0, %s165
      %s167 = sphi 0, %s165
      %s168 = sphi 0, %s167
      %s182 = sphi 0, %s168
      %s186 = sphi 0, %s186
      %s188 = sphi 0, %s186
      %s189 = sphi 0, %s188
      %s203 = sphi 0, %s189
      %s207 = sphi 0, %s207
      %s209 = sphi 0, %s207
      %s210 = sphi 0, %s209
      %s224 = sphi 0, %s210
      %s228 = sphi 0, %s228
      %s230 = sphi 0, %s228
      %s231 = sphi 0, %s230
      %s245 = sphi 0, %s231
      %s249 = sphi 0, %s249
      %s251 = sphi 0, %s249
      %s252 = sphi 0, %s251
      %s266 = sphi 0, %s252
      %s270 = sphi 0, %s270
      %s272 = sphi 0, %s270
      %s273 = sphi 0, %s272
      %s287 = sphi 0, %s273
      %s291 = sphi 0, %s291
      %s293 = sphi 0, %s291
      %s294 = sphi 0, %s293
      %s308 = sphi 0, %s294
      %s312 = sphi 0, %s312
      %s314 = sphi 0, %s312
      %s315 = sphi 0, %s314
      %s329 = sphi 0, %s315
      %s333 = sphi 0, %s333
      %s335 = sphi 0, %s333
      %s336 = sphi 0, %s335
      %s350 = sphi 0, %s336
      %s358 = sphi 0, %s360
      %s361 = sphi 0, %s358
      %s362 = sphi 0, %s361
      %s378 = sphi 0, %s362
      %s384 = sphi 0, %s386
      %s387 = sphi 0, %s384
      %s388 = sphi 0, %s387
      %s404 = sphi 0, %s388
    $region4: #{tpu_custom_call.1} parent=1 // loop_header_branch
      %42 = sbr.rel (%p40) target = $region8
    $region5: #{tpu_custom_call.1} parent=1 // loop_body
      %s44 = ssub.s32 %s39, 1
      %s45 = ssub.s32 %s39, 2
      %s52 = sadd.s32 1, %s47
      %p53 = scmp.ge.s32.totalorder %s52, 1
      %s54 = scalar_select %p53, 0, %s52
      %s55 = sadd.s32 1, %s46
      %s56 = scalar_select %p53, %s55, %s46
      %p57 = scmp.ge.s32.totalorder %s56, 2
      %s58 = scalar_select %p57, 0, %s56
      %s59 = ssub.s32 %s46, %s58
      %p60 = scmp.eq.s32.totalorder %s59, 0
      %s62 = sadd.s32 %s61, 1
      %s63 = scalar_select %p60, %s61, %s62
      %p66 = pneg %p60
      %p67 = scmp.eq.s32.totalorder %s39, 1
      %p68 = por %p66, %p67
      %p69 = scmp.ne.s32.totalorder %s61, %s64
      %p70 = scmp.eq.s32.totalorder %s39, 0
      %p71 = por %p69, %p70
      %p72 = scmp.ne.s32.totalorder %s61, %s64
      %p73 = scmp.eq.s32.totalorder %s44, 1
      %p74 = por %p72, %p73
      %p75 = scmp.ne.s32.totalorder %s64, %s65
      %p76 = scmp.eq.s32.totalorder %s44, 0
      %p77 = por %p75, %p76
      %p78 = scmp.ne.s32.totalorder %s64, %s65
      %p79 = scmp.eq.s32.totalorder %s45, 1
      %p80 = por %p78, %p79
      %p82 = scmp.ne.s32.totalorder %s65, %s81
      %p83 = scmp.eq.s32.totalorder %s45, 0
      %p84 = por %p82, %p83
      %s85 = ssub.s32 %s46, %s58
      %p86 = scmp.eq.s32.totalorder %s85, 0
      %s88 = sadd.s32 %s87, 1
      %s89 = scalar_select %p86, %s87, %s88
      %p92 = pneg %p86
      %p93 = scmp.eq.s32.totalorder %s39, 1
      %p94 = por %p92, %p93
      %p95 = scmp.ne.s32.totalorder %s87, %s90
      %p96 = scmp.eq.s32.totalorder %s39, 0
      %p97 = por %p95, %p96
      %p98 = scmp.ne.s32.totalorder %s87, %s90
      %p99 = scmp.eq.s32.totalorder %s44, 1
      %p100 = por %p98, %p99
      %p101 = scmp.ne.s32.totalorder %s90, %s91
      %p102 = scmp.eq.s32.totalorder %s44, 0
      %p103 = por %p101, %p102
      %p104 = scmp.ne.s32.totalorder %s90, %s91
      %p105 = scmp.eq.s32.totalorder %s45, 1
      %p106 = por %p104, %p105
      %p108 = scmp.ne.s32.totalorder %s91, %s107
      %p109 = scmp.eq.s32.totalorder %s45, 0
      %p110 = por %p108, %p109
      %s111 = ssub.s32 %s46, %s58
      %p112 = scmp.eq.s32.totalorder %s111, 0
      %s114 = sadd.s32 %s113, 1
      %s115 = scalar_select %p112, %s113, %s114
      %p118 = pneg %p112
      %p119 = scmp.eq.s32.totalorder %s39, 1
      %p120 = por %p118, %p119
      %p121 = scmp.ne.s32.totalorder %s113, %s116
      %p122 = scmp.eq.s32.totalorder %s39, 0
      %p123 = por %p121, %p122
      %p124 = scmp.ne.s32.totalorder %s113, %s116
      %p125 = scmp.eq.s32.totalorder %s44, 1
      %p126 = por %p124, %p125
      %p127 = scmp.ne.s32.totalorder %s116, %s117
      %p128 = scmp.eq.s32.totalorder %s44, 0
      %p129 = por %p127, %p128
      %p130 = scmp.ne.s32.totalorder %s116, %s117
      %p131 = scmp.eq.s32.totalorder %s45, 1
      %p132 = por %p130, %p131
      %p134 = scmp.ne.s32.totalorder %s117, %s133
      %p135 = scmp.eq.s32.totalorder %s45, 0
      %p136 = por %p134, %p135
      %s137 = ssub.s32 %s47, %s54
      %s138 = ssub.s32 %s46, %s58
      %s139 = sor.u32 %s137, %s138
      %p140 = scmp.eq.s32.totalorder %s139, 0
      %s142 = sadd.s32 %s141, 1
      %s143 = scalar_select %p140, %s141, %s142
      %p146 = pneg %p140
      %p147 = scmp.eq.s32.totalorder %s39, 1
      %p148 = por %p146, %p147
      %p149 = scmp.ne.s32.totalorder %s141, %s144
      %p150 = scmp.eq.s32.totalorder %s39, 0
      %p151 = por %p149, %p150
      %p152 = scmp.ne.s32.totalorder %s141, %s144
      %p153 = scmp.eq.s32.totalorder %s44, 1
      %p154 = por %p152, %p153
      %p155 = scmp.ne.s32.totalorder %s144, %s145
      %p156 = scmp.eq.s32.totalorder %s44, 0
      %p157 = por %p155, %p156
      %p158 = scmp.ne.s32.totalorder %s144, %s145
      %p159 = scmp.eq.s32.totalorder %s45, 1
      %p160 = por %p158, %p159
      %p162 = scmp.ne.s32.totalorder %s145, %s161
      %p163 = scmp.eq.s32.totalorder %s45, 0
      %p164 = por %p162, %p163
      %s166 = sadd.s32 %s165, 1
      %p169 = scmp.eq.s32.totalorder %s39, 1
      %p170 = scmp.ne.s32.totalorder %s165, %s167
      %p171 = scmp.eq.s32.totalorder %s39, 0
      %p172 = por %p170, %p171
      %p173 = scmp.ne.s32.totalorder %s165, %s167
      %p174 = scmp.eq.s32.totalorder %s44, 1
      %p175 = por %p173, %p174
      %p176 = scmp.ne.s32.totalorder %s167, %s168
      %p177 = scmp.eq.s32.totalorder %s44, 0
      %p178 = por %p176, %p177
      %p179 = scmp.ne.s32.totalorder %s167, %s168
      %p180 = scmp.eq.s32.totalorder %s45, 1
      %p181 = por %p179, %p180
      %p183 = scmp.ne.s32.totalorder %s168, %s182
      %p184 = scmp.eq.s32.totalorder %s45, 0
      %p185 = por %p183, %p184
      %s187 = sadd.s32 %s186, 1
      %p190 = scmp.eq.s32.totalorder %s39, 1
      %p191 = scmp.ne.s32.totalorder %s186, %s188
      %p192 = scmp.eq.s32.totalorder %s39, 0
      %p193 = por %p191, %p192
      %p194 = scmp.ne.s32.totalorder %s186, %s188
      %p195 = scmp.eq.s32.totalorder %s44, 1
      %p196 = por %p194, %p195
      %p197 = scmp.ne.s32.totalorder %s188, %s189
      %p198 = scmp.eq.s32.totalorder %s44, 0
      %p199 = por %p197, %p198
      %p200 = scmp.ne.s32.totalorder %s188, %s189
      %p201 = scmp.eq.s32.totalorder %s45, 1
      %p202 = por %p200, %p201
      %p204 = scmp.ne.s32.totalorder %s189, %s203
      %p205 = scmp.eq.s32.totalorder %s45, 0
      %p206 = por %p204, %p205
      %s208 = sadd.s32 %s207, 1
      %p211 = scmp.eq.s32.totalorder %s39, 1
      %p212 = scmp.ne.s32.totalorder %s207, %s209
      %p213 = scmp.eq.s32.totalorder %s39, 0
      %p214 = por %p212, %p213
      %p215 = scmp.ne.s32.totalorder %s207, %s209
      %p216 = scmp.eq.s32.totalorder %s44, 1
      %p217 = por %p215, %p216
      %p218 = scmp.ne.s32.totalorder %s209, %s210
      %p219 = scmp.eq.s32.totalorder %s44, 0
      %p220 = por %p218, %p219
      %p221 = scmp.ne.s32.totalorder %s209, %s210
      %p222 = scmp.eq.s32.totalorder %s45, 1
      %p223 = por %p221, %p222
      %p225 = scmp.ne.s32.totalorder %s210, %s224
      %p226 = scmp.eq.s32.totalorder %s45, 0
      %p227 = por %p225, %p226
      %s229 = sadd.s32 %s228, 1
      %p232 = scmp.eq.s32.totalorder %s39, 1
      %p233 = scmp.ne.s32.totalorder %s228, %s230
      %p234 = scmp.eq.s32.totalorder %s39, 0
      %p235 = por %p233, %p234
      %p236 = scmp.ne.s32.totalorder %s228, %s230
      %p237 = scmp.eq.s32.totalorder %s44, 1
      %p238 = por %p236, %p237
      %p239 = scmp.ne.s32.totalorder %s230, %s231
      %p240 = scmp.eq.s32.totalorder %s44, 0
      %p241 = por %p239, %p240
      %p242 = scmp.ne.s32.totalorder %s230, %s231
      %p243 = scmp.eq.s32.totalorder %s45, 1
      %p244 = por %p242, %p243
      %p246 = scmp.ne.s32.totalorder %s231, %s245
      %p247 = scmp.eq.s32.totalorder %s45, 0
      %p248 = por %p246, %p247
      %s250 = sadd.s32 %s249, 1
      %p253 = scmp.eq.s32.totalorder %s39, 1
      %p254 = scmp.ne.s32.totalorder %s249, %s251
      %p255 = scmp.eq.s32.totalorder %s39, 0
      %p256 = por %p254, %p255
      %p257 = scmp.ne.s32.totalorder %s249, %s251
      %p258 = scmp.eq.s32.totalorder %s44, 1
      %p259 = por %p257, %p258
      %p260 = scmp.ne.s32.totalorder %s251, %s252
      %p261 = scmp.eq.s32.totalorder %s44, 0
      %p262 = por %p260, %p261
      %p263 = scmp.ne.s32.totalorder %s251, %s252
      %p264 = scmp.eq.s32.totalorder %s45, 1
      %p265 = por %p263, %p264
      %p267 = scmp.ne.s32.totalorder %s252, %s266
      %p268 = scmp.eq.s32.totalorder %s45, 0
      %p269 = por %p267, %p268
      %s271 = sadd.s32 %s270, 1
      %p274 = scmp.eq.s32.totalorder %s39, 1
      %p275 = scmp.ne.s32.totalorder %s270, %s272
      %p276 = scmp.eq.s32.totalorder %s39, 0
      %p277 = por %p275, %p276
      %p278 = scmp.ne.s32.totalorder %s270, %s272
      %p279 = scmp.eq.s32.totalorder %s44, 1
      %p280 = por %p278, %p279
      %p281 = scmp.ne.s32.totalorder %s272, %s273
      %p282 = scmp.eq.s32.totalorder %s44, 0
      %p283 = por %p281, %p282
      %p284 = scmp.ne.s32.totalorder %s272, %s273
      %p285 = scmp.eq.s32.totalorder %s45, 1
      %p286 = por %p284, %p285
      %p288 = scmp.ne.s32.totalorder %s273, %s287
      %p289 = scmp.eq.s32.totalorder %s45, 0
      %p290 = por %p288, %p289
      %s292 = sadd.s32 %s291, 1
      %p295 = scmp.eq.s32.totalorder %s39, 1
      %p296 = scmp.ne.s32.totalorder %s291, %s293
      %p297 = scmp.eq.s32.totalorder %s39, 0
      %p298 = por %p296, %p297
      %p299 = scmp.ne.s32.totalorder %s291, %s293
      %p300 = scmp.eq.s32.totalorder %s44, 1
      %p301 = por %p299, %p300
      %p302 = scmp.ne.s32.totalorder %s293, %s294
      %p303 = scmp.eq.s32.totalorder %s44, 0
      %p304 = por %p302, %p303
      %p305 = scmp.ne.s32.totalorder %s293, %s294
      %p306 = scmp.eq.s32.totalorder %s45, 1
      %p307 = por %p305, %p306
      %p309 = scmp.ne.s32.totalorder %s294, %s308
      %p310 = scmp.eq.s32.totalorder %s45, 0
      %p311 = por %p309, %p310
      %s313 = sadd.s32 %s312, 1
      %p316 = scmp.eq.s32.totalorder %s39, 1
      %p317 = scmp.ne.s32.totalorder %s312, %s314
      %p318 = scmp.eq.s32.totalorder %s39, 0
      %p319 = por %p317, %p318
      %p320 = scmp.ne.s32.totalorder %s312, %s314
      %p321 = scmp.eq.s32.totalorder %s44, 1
      %p322 = por %p320, %p321
      %p323 = scmp.ne.s32.totalorder %s314, %s315
      %p324 = scmp.eq.s32.totalorder %s44, 0
      %p325 = por %p323, %p324
      %p326 = scmp.ne.s32.totalorder %s314, %s315
      %p327 = scmp.eq.s32.totalorder %s45, 1
      %p328 = por %p326, %p327
      %p330 = scmp.ne.s32.totalorder %s315, %s329
      %p331 = scmp.eq.s32.totalorder %s45, 0
      %p332 = por %p330, %p331
      %s334 = sadd.s32 %s333, 1
      %p337 = scmp.eq.s32.totalorder %s39, 1
      %p338 = scmp.ne.s32.totalorder %s333, %s335
      %p339 = scmp.eq.s32.totalorder %s39, 0
      %p340 = por %p338, %p339
      %p341 = scmp.ne.s32.totalorder %s333, %s335
      %p342 = scmp.eq.s32.totalorder %s44, 1
      %p343 = por %p341, %p342
      %p344 = scmp.ne.s32.totalorder %s335, %s336
      %p345 = scmp.eq.s32.totalorder %s44, 0
      %p346 = por %p344, %p345
      %p347 = scmp.ne.s32.totalorder %s335, %s336
      %p348 = scmp.eq.s32.totalorder %s45, 1
      %p349 = por %p347, %p348
      %p351 = scmp.ne.s32.totalorder %s336, %s350
      %p352 = scmp.eq.s32.totalorder %s45, 0
      %p353 = por %p351, %p352
      %s354 = ssub.s32 %s47, %s54
      %s355 = ssub.s32 %s46, %s58
      %s356 = sor.u32 %s354, %s355
      %p357 = scmp.eq.s32.totalorder %s356, 0
      %s359 = sadd.s32 %s358, 1
      %s360 = scalar_select %p357, %s358, %s359
      %p363 = pneg %p357
      %p364 = scmp.eq.s32.totalorder %s39, 1
      %p365 = por %p363, %p364
      %p366 = scmp.ne.s32.totalorder %s358, %s361
      %p367 = scmp.eq.s32.totalorder %s39, 0
      %p368 = por %p366, %p367
      %p369 = scmp.ne.s32.totalorder %s358, %s361
      %p370 = scmp.eq.s32.totalorder %s44, 1
      %p371 = por %p369, %p370
      %p372 = scmp.ne.s32.totalorder %s361, %s362
      %p373 = scmp.eq.s32.totalorder %s44, 0
      %p374 = por %p372, %p373
      %p375 = scmp.ne.s32.totalorder %s361, %s362
      %p376 = scmp.eq.s32.totalorder %s45, 1
      %p377 = por %p375, %p376
      %p379 = scmp.ne.s32.totalorder %s362, %s378
      %p380 = scmp.eq.s32.totalorder %s45, 0
      %p381 = por %p379, %p380
      %s382 = ssub.s32 %s46, %s58
      %p383 = scmp.eq.s32.totalorder %s382, 0
      %s385 = sadd.s32 %s384, 1
      %s386 = scalar_select %p383, %s384, %s385
      %p389 = pneg %p383
      %p390 = scmp.eq.s32.totalorder %s39, 1
      %p391 = por %p389, %p390
      %p392 = scmp.ne.s32.totalorder %s384, %s387
      %p393 = scmp.eq.s32.totalorder %s39, 0
      %p394 = por %p392, %p393
      %p395 = scmp.ne.s32.totalorder %s384, %s387
      %p396 = scmp.eq.s32.totalorder %s44, 1
      %p397 = por %p395, %p396
      %p398 = scmp.ne.s32.totalorder %s387, %s388
      %p399 = scmp.eq.s32.totalorder %s44, 0
      %p400 = por %p398, %p399
      %p401 = scmp.ne.s32.totalorder %s387, %s388
      %p402 = scmp.eq.s32.totalorder %s45, 1
      %p403 = por %p401, %p402
      %p405 = scmp.ne.s32.totalorder %s388, %s404
      %p406 = scmp.eq.s32.totalorder %s45, 0
      %p407 = por %p405, %p406
      %p408 = scmp.le.s32.totalorder 1, %s39
      %p409 = scmp.lt.s32.totalorder %s39, 3
      %p410 = pnand %p408, %p409
      %p411 = pneg %p410
      // Predicated region
      $region9: #{tpu_custom_call.1} parent=5 // pred_check
        _
      $region10: #{tpu_custom_call.1} parent=5 // pred_check_branch
        %413 = sbr.rel (%p410) target = $region12
      $region11: #{tpu_custom_call.1} parent=5 // pred_region
        %s414 = ssub.s32 %s39, 1
        // Predicated region
        $region13: #{tpu_custom_call.1} parent=11 // pred_check
          %p415 = pneg %p178
        $region14: #{tpu_custom_call.1} parent=11 // pred_check_branch
          %417 = sbr.rel (%p415) target = $region16
        $region15: #{tpu_custom_call.1} parent=11 // pred_region
          _
        $region16: #{tpu_custom_call.1} parent=11 // pred_fallthru
          _
        // Predicated region
        $region17: #{tpu_custom_call.1} parent=11 // pred_check
          %p418 = pneg %p199
        $region18: #{tpu_custom_call.1} parent=11 // pred_check_branch
          %420 = sbr.rel (%p418) target = $region20
        $region19: #{tpu_custom_call.1} parent=11 // pred_region
          _
        $region20: #{tpu_custom_call.1} parent=11 // pred_fallthru
          _
        // Predicated region
        $region21: #{tpu_custom_call.1} parent=11 // pred_check
          %p421 = pneg %p220
        $region22: #{tpu_custom_call.1} parent=11 // pred_check_branch
          %423 = sbr.rel (%p421) target = $region24
        $region23: #{tpu_custom_call.1} parent=11 // pred_region
          _
        $region24: #{tpu_custom_call.1} parent=11 // pred_fallthru
          _
        // Predicated region
        $region25: #{tpu_custom_call.1} parent=11 // pred_check
          %p424 = pneg %p241
        $region26: #{tpu_custom_call.1} parent=11 // pred_check_branch
          %426 = sbr.rel (%p424) target = $region28
        $region27: #{tpu_custom_call.1} parent=11 // pred_region
          %428 = vsyncadd [#allocation13], 0
          %s429 = sshll.u32 %s7, 4
          %s430 = int_to_ptr.hbm [resolvable:$true] %s429
          %s431 = sshll.u32 [#allocation14], 4
          %s432 = int_to_ptr.vmem [resolvable:$true] %s431
          %437 = dma.hbm_to_vmem [thread:$0]  %s430, 1024, %s432, [#allocation13], 128, 128, 8
        $region28: #{tpu_custom_call.1} parent=11 // pred_fallthru
          _
        // Predicated region
        $region29: #{tpu_custom_call.1} parent=11 // pred_check
          %p438 = pneg %p262
        $region30: #{tpu_custom_call.1} parent=11 // pred_check_branch
          %440 = sbr.rel (%p438) target = $region32
        $region31: #{tpu_custom_call.1} parent=11 // pred_region
          %442 = vsyncadd [#allocation16], 0
          %s443 = sshll.u32 %s8, 4
          %s444 = int_to_ptr.hbm [resolvable:$true] %s443
          %s445 = sshll.u32 [#allocation15], 4
          %s446 = int_to_ptr.vmem [resolvable:$true] %s445
          %451 = dma.hbm_to_vmem [thread:$0]  %s444, 256, %s446, [#allocation16], 128, 128, 8
        $region32: #{tpu_custom_call.1} parent=11 // pred_fallthru
          _
        // Predicated region
        $region33: #{tpu_custom_call.1} parent=11 // pred_check
          %p452 = pneg %p283
        $region34: #{tpu_custom_call.1} parent=11 // pred_check_branch
          %454 = sbr.rel (%p452) target = $region36
        $region35: #{tpu_custom_call.1} parent=11 // pred_region
          %456 = vsyncadd [#allocation16], 0
          %s457 = sshll.u32 %s9, 4
          %s458 = int_to_ptr.hbm [resolvable:$true] %s457
          %s459 = sshll.u32 [#allocation17], 4
          %s460 = int_to_ptr.vmem [resolvable:$true] %s459
          %465 = dma.hbm_to_vmem [thread:$0]  %s458, 512, %s460, [#allocation16], 128, 128, 8
        $region36: #{tpu_custom_call.1} parent=11 // pred_fallthru
          _
        // Predicated region
        $region37: #{tpu_custom_call.1} parent=11 // pred_check
          %p466 = pneg %p304
        $region38: #{tpu_custom_call.1} parent=11 // pred_check_branch
          %468 = sbr.rel (%p466) target = $region40
        $region39: #{tpu_custom_call.1} parent=11 // pred_region
          _
        $region40: #{tpu_custom_call.1} parent=11 // pred_fallthru
          _
        // Predicated region
        $region41: #{tpu_custom_call.1} parent=11 // pred_check
          %p469 = pneg %p325
        $region42: #{tpu_custom_call.1} parent=11 // pred_check_branch
          %471 = sbr.rel (%p469) target = $region44
        $region43: #{tpu_custom_call.1} parent=11 // pred_region
          %473 = vsyncadd [#allocation19], 0
          %s474 = sshll.u32 %s11, 4
          %s475 = int_to_ptr.hbm [resolvable:$true] %s474
          %s476 = sshll.u32 [#allocation18], 4
          %s477 = int_to_ptr.vmem [resolvable:$true] %s476
          %482 = dma.hbm_to_vmem [thread:$0]  %s475, 512, %s477, [#allocation19], 128, 128, 8
        $region44: #{tpu_custom_call.1} parent=11 // pred_fallthru
          _
        // Predicated region
        $region45: #{tpu_custom_call.1} parent=11 // pred_check
          %p483 = pneg %p346
        $region46: #{tpu_custom_call.1} parent=11 // pred_check_branch
          %485 = sbr.rel (%p483) target = $region48
        $region47: #{tpu_custom_call.1} parent=11 // pred_region
          _
        $region48: #{tpu_custom_call.1} parent=11 // pred_fallthru
          _
      $region12: #{tpu_custom_call.1} parent=5 // pred_fallthru
        _
      %p486 = scmp.lt.s32.totalorder %s39, 2
      // Predicated region
      $region49: #{tpu_custom_call.1} parent=5 // pred_check
        %p487 = pneg %p486
      $region50: #{tpu_custom_call.1} parent=5 // pred_check_branch
        %489 = sbr.rel (%p487) target = $region52
      $region51: #{tpu_custom_call.1} parent=5 // pred_region
        // Predicated region
        $region53: #{tpu_custom_call.1} parent=51 // pred_check
          %p490 = pneg %p71
        $region54: #{tpu_custom_call.1} parent=51 // pred_check_branch
          %492 = sbr.rel (%p490) target = $region56
        $region55: #{tpu_custom_call.1} parent=51 // pred_region
          %s493 = sand.u32 %s61, 1
          %s494 = scalar_lea.sflag [#allocation7], %s493
          %s495 = sand.u32 %s61, 1
          %s496 = smul.addr %s495, 64
          %s497 = scalar_lea.vmem [#allocation6], %s496
          %s498 = smul.u32 8, %s46
          %500 = vsyncadd %s494, 0
          %s501 = smul.addr %s498, 8
          %s502 = scalar_lea.hbm %s0, %s501
          %s503 = sshll.u32 %s502, 4
          %s504 = int_to_ptr.hbm [resolvable:$true] %s503
          %s505 = sshll.u32 %s497, 4
          %s506 = int_to_ptr.vmem [resolvable:$true] %s505
          %511 = dma.hbm_to_vmem [thread:$0]  %s504, 1024, %s506, %s494, 128, 128, 8
        $region56: #{tpu_custom_call.1} parent=51 // pred_fallthru
          _
        // Predicated region
        $region57: #{tpu_custom_call.1} parent=51 // pred_check
          %p512 = pneg %p97
        $region58: #{tpu_custom_call.1} parent=51 // pred_check_branch
          %514 = sbr.rel (%p512) target = $region60
        $region59: #{tpu_custom_call.1} parent=51 // pred_region
          %s515 = sand.u32 %s39, 1
          %s516 = scalar_lea.sflag [#allocation10], %s515
          %s517 = sand.u32 %s87, 1
          %s518 = smul.addr %s517, 8
          %s519 = scalar_lea.vmem [#allocation9], %s518
          %521 = vsyncadd %s516, 0
          %s522 = smul.addr %s46, 8
          %s523 = scalar_lea.hbm %s1, %s522
          %s525 = sshll.u32 %s523, 4
          %s526 = int_to_ptr.hbm [resolvable:$true] %s525
          %s527 = sshll.u32 %s519, 4
          %s528 = int_to_ptr.vmem [resolvable:$true] %s527
          %530 = dma.hbm_to_vmem [thread:$0]  %s526, 128, %s528, %s516
        $region60: #{tpu_custom_call.1} parent=51 // pred_fallthru
          _
        // Predicated region
        $region61: #{tpu_custom_call.1} parent=51 // pred_check
          %p531 = pneg %p123
        $region62: #{tpu_custom_call.1} parent=51 // pred_check_branch
          %533 = sbr.rel (%p531) target = $region64
        $region63: #{tpu_custom_call.1} parent=51 // pred_region
          %s534 = sand.u32 %s39, 1
          %s535 = scalar_lea.sflag [#allocation10], %s534
          %s536 = sand.u32 %s113, 1
          %s537 = smul.addr %s536, 8
          %s538 = scalar_lea.vmem [#allocation11], %s537
          %540 = vsyncadd %s535, 0
          %s541 = smul.addr %s46, 8
          %s542 = scalar_lea.hbm %s2, %s541
          %s544 = sshll.u32 %s542, 4
          %s545 = int_to_ptr.hbm [resolvable:$true] %s544
          %s546 = sshll.u32 %s538, 4
          %s547 = int_to_ptr.vmem [resolvable:$true] %s546
          %549 = dma.hbm_to_vmem [thread:$0]  %s545, 128, %s547, %s535
        $region64: #{tpu_custom_call.1} parent=51 // pred_fallthru
          _
        // Predicated region
        $region65: #{tpu_custom_call.1} parent=51 // pred_check
          %p550 = pneg %p151
        $region66: #{tpu_custom_call.1} parent=51 // pred_check_branch
          %552 = sbr.rel (%p550) target = $region68
        $region67: #{tpu_custom_call.1} parent=51 // pred_region
          %s553 = sand.u32 %s39, 1
          %s554 = scalar_lea.sflag [#allocation13], %s553
          %s555 = sand.u32 %s141, 1
          %s556 = smul.addr %s555, 8
          %s557 = scalar_lea.vmem [#allocation12], %s556
          %559 = vsyncadd %s554, 0
          %s560 = smul.addr %s47, 2
          %s561 = sadd.s32 %s46, %s560
          %s562 = smul.addr %s561, 8
          %s563 = scalar_lea.hbm %s3, %s562
          %s565 = sshll.u32 %s563, 4
          %s566 = int_to_ptr.hbm [resolvable:$true] %s565
          %s567 = sshll.u32 %s557, 4
          %s568 = int_to_ptr.vmem [resolvable:$true] %s567
          %570 = dma.hbm_to_vmem [thread:$0]  %s566, 128, %s568, %s554
        $region68: #{tpu_custom_call.1} parent=51 // pred_fallthru
          _
      $region52: #{tpu_custom_call.1} parent=5 // pred_fallthru
        _
      %p571 = scmp.le.s32.totalorder 1, %s39
      %p572 = scmp.lt.s32.totalorder %s39, 3
      %p573 = pnand %p571, %p572
      %p574 = pneg %p573
      // Predicated region
      $region69: #{tpu_custom_call.1} parent=5 // pred_check
        _
      $region70: #{tpu_custom_call.1} parent=5 // pred_check_branch
        %576 = sbr.rel (%p573) target = $region72
      $region71: #{tpu_custom_call.1} parent=5 // pred_region
        %s577 = ssub.s32 %s39, 1
        %s578 = sand.u32 %s64, 1
        %s579 = scalar_lea.sflag [#allocation7], %s578
        %s580 = sand.u32 %s64, 1
        %s581 = smul.addr %s580, 64
        %s582 = scalar_lea.vmem [#allocation6], %s581
        // Predicated region
        $region73: #{tpu_custom_call.1} parent=71 // pred_check
          %p583 = pneg %p77
        $region74: #{tpu_custom_call.1} parent=71 // pred_check_branch
          %585 = sbr.rel (%p583) target = $region76
        $region75: #{tpu_custom_call.1} parent=71 // pred_region
          %587 = dma.done %s579, 1024
        $region76: #{tpu_custom_call.1} parent=71 // pred_fallthru
          _
        %s588 = sand.u32 %s44, 1
        %s589 = scalar_lea.sflag [#allocation10], %s588
        %s590 = sand.u32 %s90, 1
        %s591 = smul.addr %s590, 8
        %s592 = scalar_lea.vmem [#allocation9], %s591
        // Predicated region
        $region77: #{tpu_custom_call.1} parent=71 // pred_check
          %p593 = pneg %p103
        $region78: #{tpu_custom_call.1} parent=71 // pred_check_branch
          %595 = sbr.rel (%p593) target = $region80
        $region79: #{tpu_custom_call.1} parent=71 // pred_region
          %597 = dma.done %s589, 128
        $region80: #{tpu_custom_call.1} parent=71 // pred_fallthru
          _
        %s598 = sand.u32 %s44, 1
        %s599 = scalar_lea.sflag [#allocation10], %s598
        %s600 = sand.u32 %s116, 1
        %s601 = smul.addr %s600, 8
        %s602 = scalar_lea.vmem [#allocation11], %s601
        // Predicated region
        $region81: #{tpu_custom_call.1} parent=71 // pred_check
          %p603 = pneg %p129
        $region82: #{tpu_custom_call.1} parent=71 // pred_check_branch
          %605 = sbr.rel (%p603) target = $region84
        $region83: #{tpu_custom_call.1} parent=71 // pred_region
          %607 = dma.done %s599, 128
        $region84: #{tpu_custom_call.1} parent=71 // pred_fallthru
          _
        %s608 = sand.u32 %s44, 1
        %s609 = scalar_lea.sflag [#allocation13], %s608
        %s610 = sand.u32 %s144, 1
        %s611 = smul.addr %s610, 8
        %s612 = scalar_lea.vmem [#allocation12], %s611
        // Predicated region
        $region85: #{tpu_custom_call.1} parent=71 // pred_check
          %p613 = pneg %p157
        $region86: #{tpu_custom_call.1} parent=71 // pred_check_branch
          %615 = sbr.rel (%p613) target = $region88
        $region87: #{tpu_custom_call.1} parent=71 // pred_region
          %617 = dma.done %s609, 128
        $region88: #{tpu_custom_call.1} parent=71 // pred_fallthru
          _
        // Predicated region
        $region89: #{tpu_custom_call.1} parent=71 // pred_check
          %p618 = pneg %p241
        $region90: #{tpu_custom_call.1} parent=71 // pred_check_branch
          %620 = sbr.rel (%p618) target = $region92
        $region91: #{tpu_custom_call.1} parent=71 // pred_region
          %622 = dma.done [#allocation13], 1024
        $region92: #{tpu_custom_call.1} parent=71 // pred_fallthru
          _
        // Predicated region
        $region93: #{tpu_custom_call.1} parent=71 // pred_check
          %p623 = pneg %p262
        $region94: #{tpu_custom_call.1} parent=71 // pred_check_branch
          %625 = sbr.rel (%p623) target = $region96
        $region95: #{tpu_custom_call.1} parent=71 // pred_region
          %627 = dma.done [#allocation16], 256
        $region96: #{tpu_custom_call.1} parent=71 // pred_fallthru
          _
        // Predicated region
        $region97: #{tpu_custom_call.1} parent=71 // pred_check
          %p628 = pneg %p283
        $region98: #{tpu_custom_call.1} parent=71 // pred_check_branch
          %630 = sbr.rel (%p628) target = $region100
        $region99: #{tpu_custom_call.1} parent=71 // pred_region
          %632 = dma.done [#allocation16], 512
        $region100: #{tpu_custom_call.1} parent=71 // pred_fallthru
          _
        // Predicated region
        $region101: #{tpu_custom_call.1} parent=71 // pred_check
          %p633 = pneg %p325
        $region102: #{tpu_custom_call.1} parent=71 // pred_check_branch
          %635 = sbr.rel (%p633) target = $region104
        $region103: #{tpu_custom_call.1} parent=71 // pred_region
          %637 = dma.done [#allocation19], 512
        $region104: #{tpu_custom_call.1} parent=71 // pred_fallthru
          _
        %s638 = sand.u32 %s64, 1
        %s639 = scalar_lea.sflag [#allocation7], %s638
        %s640 = sand.u32 %s64, 1
        %s641 = smul.addr %s640, 64
        %s642 = scalar_lea.vmem [#allocation6], %s641
        %p643 = pneg %p77
        %p644 = pneg %p74
        %s645 = sand.u32 %s44, 1
        %s646 = scalar_lea.sflag [#allocation10], %s645
        %s647 = sand.u32 %s90, 1
        %s648 = smul.addr %s647, 8
        %s649 = scalar_lea.vmem [#allocation9], %s648
        %p650 = pneg %p103
        %p651 = pneg %p100
        %s652 = sand.u32 %s44, 1
        %s653 = scalar_lea.sflag [#allocation10], %s652
        %s654 = sand.u32 %s116, 1
        %s655 = smul.addr %s654, 8
        %s656 = scalar_lea.vmem [#allocation11], %s655
        %p657 = pneg %p129
        %p658 = pneg %p126
        %s659 = sand.u32 %s44, 1
        %s660 = scalar_lea.sflag [#allocation13], %s659
        %s661 = sand.u32 %s144, 1
        %s662 = smul.addr %s661, 8
        %s663 = scalar_lea.vmem [#allocation12], %s662
        %p664 = pneg %p157
        %p665 = pneg %p154
        %p666 = pneg %p178
        %p667 = pneg %p175
        %p668 = pneg %p199
        %p669 = pneg %p196
        %p670 = pneg %p220
        %p671 = pneg %p217
        %p672 = pneg %p241
        %p673 = pneg %p238
        %p674 = pneg %p262
        %p675 = pneg %p259
        %p676 = pneg %p283
        %p677 = pneg %p280
        %p678 = pneg %p304
        %p679 = pneg %p301
        %p680 = pneg %p325
        %p681 = pneg %p322
        %p682 = pneg %p346
        %p683 = pneg %p343
        %p684 = pneg %p374
        %p685 = pneg %p371
        %s686 = sand.u32 %s361, 1
        %s687 = scalar_lea.sflag [#allocation8], %s686
        %s688 = sand.u32 %s361, 1
        %s689 = smul.addr %s688, 8
        %s690 = scalar_lea.vmem [#allocation20], %s689
        %p691 = pneg %p400
        %p692 = pneg %p397
        %s693 = sand.u32 %s387, 1
        %s694 = scalar_lea.sflag [#allocation22], %s693
        %s695 = sand.u32 %s387, 1
        %s696 = smul.addr %s695, 16
        %s697 = scalar_lea.vmem [#allocation21], %s696
        %s698 = smul.u32 8, %s48
        %p699 = scmp.eq.s32.totalorder %s49, 0
        // Predicated region
        $region105: #{tpu_custom_call.1} parent=71 // pred_check
          %p700 = pneg %p699
        $region106: #{tpu_custom_call.1} parent=71 // pred_check_branch
          %702 = sbr.rel (%p700) target = $region108
        $region107: #{tpu_custom_call.1} parent=71 // pred_region
          %v703 = vld [vmem:[%s592] sm:$0xff]
          %vm704 = vcmask 261120
          %705 = vst.msk [vmem:[#allocation2] sm:$0xff] %vm704, %v703
          %v706 = vld [vmem:[%s602] sm:$0xff]
          %707 = vst.msk [vmem:[#allocation3] sm:$0xff] %vm704, %v706
          %v708 = vld [vmem:[%s582] sm:$0xff]
          %v709 = vld [vmem:[%s582 + $0x8] sm:$0xff]
          %v710 = vld [vmem:[%s582 + $0x10] sm:$0xff]
          %v711 = vld [vmem:[%s582 + $0x18] sm:$0xff]
          %v712 = vld [vmem:[%s582 + $0x20] sm:$0xff]
          %v713 = vld [vmem:[%s582 + $0x28] sm:$0xff]
          %v714 = vld [vmem:[%s582 + $0x30] sm:$0xff]
          %v715 = vld [vmem:[%s582 + $0x38] sm:$0xff]
          %v716 = vld [vmem:[%s5] sm:$0x1]
          %v718 = vperm.slane %v716, 0
          %v720 = vmul.f32 %v708, %v718
          %v721 = vmul.f32 %v709, %v718
          %v722 = vmul.f32 %v710, %v718
          %v723 = vmul.f32 %v711, %v718
          %v724 = vmul.f32 %v712, %v718
          %v725 = vmul.f32 %v713, %v718
          %v726 = vmul.f32 %v714, %v718
          %v727 = vmul.f32 %v715, %v718
          %vm728 = vcmask 523264
          %v729 = vsel %vm728, %v720, 0.0
          %730 = vadd.xlane.f32.xlu0 %v729
          %v731 = vpop.xlane.xlu0 %730
          %v732 = vsel %vm728, %v721, 0.0
          %733 = vadd.xlane.f32.xlu0 %v732
          %v734 = vpop.xlane.xlu0 %733
          %v735 = vsel %vm728, %v722, 0.0
          %736 = vadd.xlane.f32.xlu0 %v735
          %v737 = vpop.xlane.xlu0 %736
          %v738 = vsel %vm728, %v723, 0.0
          %739 = vadd.xlane.f32.xlu0 %v738
          %v740 = vpop.xlane.xlu0 %739
          %v741 = vsel %vm728, %v724, 0.0
          %742 = vadd.xlane.f32.xlu0 %v741
          %v743 = vpop.xlane.xlu0 %742
          %v744 = vsel %vm728, %v725, 0.0
          %745 = vadd.xlane.f32.xlu0 %v744
          %v746 = vpop.xlane.xlu0 %745
          %v747 = vsel %vm728, %v726, 0.0
          %748 = vadd.xlane.f32.xlu0 %v747
          %v749 = vpop.xlane.xlu0 %748
          %v750 = vsel %vm728, %v727, 0.0
          %751 = vadd.xlane.f32.xlu0 %v750
          %v752 = vpop.xlane.xlu0 %751
          %s753 = sld [smem:[#allocation5]]
          %v754 = vstv %s753
          %v755 = vadd.f32 %v731, %v754
          %v756 = vadd.f32 %v734, %v754
          %v757 = vadd.f32 %v737, %v754
          %v758 = vadd.f32 %v740, %v754
          %v759 = vadd.f32 %v743, %v754
          %v760 = vadd.f32 %v746, %v754
          %v761 = vadd.f32 %v749, %v754
          %v762 = vadd.f32 %v752, %v754
          %v771 = vlaneseq
          %v772 = vand.u32 %v771, 127
          %v773 = vperm.slane %v755, %v772
          %v774 = vperm.slane %v756, %v772
          %v775 = vperm.slane %v757, %v772
          %v776 = vperm.slane %v758, %v772
          %v777 = vperm.slane %v759, %v772
          %v778 = vperm.slane %v760, %v772
          %v779 = vperm.slane %v761, %v772
          %v780 = vperm.slane %v762, %v772
          %vm781 = vcmask 1041409
          %v782 = vsel %vm781, %v774, %v773
          %vm783 = vcmask 1042434
          %v784 = vsel %vm783, %v775, %v782
          %vm785 = vcmask 1043459
          %v786 = vsel %vm785, %v776, %v784
          %vm787 = vcmask 1044484
          %v788 = vsel %vm787, %v777, %v786
          %vm789 = vcmask 1045509
          %v790 = vsel %vm789, %v778, %v788
          %vm791 = vcmask 1046534
          %v792 = vsel %vm791, %v779, %v790
          %vm793 = vcmask 1047559
          %v794 = vsel %vm793, %v780, %v792
          %vm796 = vcmask 64512
          %797 = vst.msk [vmem:[#allocation4] sm:$0xff] %vm796, %v794
        $region108: #{tpu_custom_call.1} parent=71 // pred_fallthru
          _
        %v798 = vld [vmem:[#allocation2] sm:$0xff]
        %v799 = vld [vmem:[#allocation3] sm:$0xff]
        %v800 = vld [vmem:[%s612] sm:$0xff]
        %v801 = vld [vmem:[%s4] sm:$0x1]
        %v803 = vperm.slane %v801, 0
        %v805 = vmul.f32 %v798, %v803
        %vm806 = vcmask 261120
        %v807 = vsel %vm806, %v805, 0.0
        %808 = vadd.xlane.f32.xlu0 %v807
        %v809 = vpop.xlane.xlu0 %808
        %v810 = vld [vmem:[#allocation4] sm:$0xff]
        %v811 = vadd.f32 %v810, %v809
        %v812 = vmax.f32 %v811, 0.0
        %vm813 = vcmask 64512
        %v814 = vsel %vm813, %v812, -inf
        %815 = vmax.xlane.f32.xlu0 %v814
        %v816 = vpop.xlane.xlu0 %815
        %v817 = vsub.f32 %v812, %v816
        %v818 = vmul.f32 %v817, 1.442695
        %v819 = vpow.pop %v818
        %v820 = vsel %vm813, %v819, 0.0
        %821 = vadd.xlane.f32.xlu0 %v820
        %v822 = vpop.xlane.xlu0 %821
        %v823 = vrcp.pop %v822
        %v824 = vmul.f32 %v819, %v823
        %v825 = vperm.slane %v824, 0
        %v826 = vlaneseq
        %v827 = vshrl.u32 %v826, 7
        %829 = vset.pattern.permute.xlu0 %v827
        %830 = vperm.xlu0 %829, %v825
        %v831 = vpop.permute.xlu0 %830
        %v832 = vperm.slane %v824, 1
        %v833 = vlaneseq
        %v834 = vshrl.u32 %v833, 7
        %836 = vset.pattern.permute.xlu0 %v834
        %837 = vperm.xlu0 %836, %v832
        %v838 = vpop.permute.xlu0 %837
        %v839 = vperm.slane %v824, 2
        %v840 = vlaneseq
        %v841 = vshrl.u32 %v840, 7
        %843 = vset.pattern.permute.xlu0 %v841
        %844 = vperm.xlu0 %843, %v839
        %v845 = vpop.permute.xlu0 %844
        %v846 = vperm.slane %v824, 3
        %v847 = vlaneseq
        %v848 = vshrl.u32 %v847, 7
        %850 = vset.pattern.permute.xlu0 %v848
        %851 = vperm.xlu0 %850, %v846
        %v852 = vpop.permute.xlu0 %851
        %v853 = vperm.slane %v824, 4
        %v854 = vlaneseq
        %v855 = vshrl.u32 %v854, 7
        %857 = vset.pattern.permute.xlu0 %v855
        %858 = vperm.xlu0 %857, %v853
        %v859 = vpop.permute.xlu0 %858
        %v860 = vperm.slane %v824, 5
        %v861 = vlaneseq
        %v862 = vshrl.u32 %v861, 7
        %864 = vset.pattern.permute.xlu0 %v862
        %865 = vperm.xlu0 %864, %v860
        %v866 = vpop.permute.xlu0 %865
        %v867 = vperm.slane %v824, 6
        %v868 = vlaneseq
        %v869 = vshrl.u32 %v868, 7
        %871 = vset.pattern.permute.xlu0 %v869
        %872 = vperm.xlu0 %871, %v867
        %v873 = vpop.permute.xlu0 %872
        %v874 = vperm.slane %v824, 7
        %v875 = vlaneseq
        %v876 = vshrl.u32 %v875, 7
        %878 = vset.pattern.permute.xlu0 %v876
        %879 = vperm.xlu0 %878, %v874
        %v880 = vpop.permute.xlu0 %879
        %v881 = vld [vmem:[%s582] sm:$0xff]
        %v882 = vld [vmem:[%s582 + $0x8] sm:$0xff]
        %v883 = vld [vmem:[%s582 + $0x10] sm:$0xff]
        %v884 = vld [vmem:[%s582 + $0x18] sm:$0xff]
        %v885 = vld [vmem:[%s582 + $0x20] sm:$0xff]
        %v886 = vld [vmem:[%s582 + $0x28] sm:$0xff]
        %v887 = vld [vmem:[%s582 + $0x30] sm:$0xff]
        %v888 = vld [vmem:[%s582 + $0x38] sm:$0xff]
        %v889 = vmul.f32 %v831, %v881
        %v890 = vmul.f32 %v838, %v882
        %v891 = vmul.f32 %v845, %v883
        %v892 = vmul.f32 %v852, %v884
        %v893 = vmul.f32 %v859, %v885
        %v894 = vmul.f32 %v866, %v886
        %v895 = vmul.f32 %v873, %v887
        %v896 = vmul.f32 %v880, %v888
        %vm897 = vcmask 523264
        %v898 = vsel %vm897, %v889, 0.0
        %v899 = vrot.slane %v898, 4
        %v900 = vadd.f32 %v898, %v899
        %v901 = vrot.slane %v900, 2
        %v902 = vadd.f32 %v900, %v901
        %v903 = vrot.slane %v902, 1
        %v904 = vadd.f32 %v902, %v903
        %v905 = vsel %vm897, %v890, 0.0
        %v906 = vrot.slane %v905, 4
        %v907 = vadd.f32 %v905, %v906
        %v908 = vrot.slane %v907, 2
        %v909 = vadd.f32 %v907, %v908
        %v910 = vrot.slane %v909, 1
        %v911 = vadd.f32 %v909, %v910
        %v912 = vsel %vm897, %v891, 0.0
        %v913 = vrot.slane %v912, 4
        %v914 = vadd.f32 %v912, %v913
        %v915 = vrot.slane %v914, 2
        %v916 = vadd.f32 %v914, %v915
        %v917 = vrot.slane %v916, 1
        %v918 = vadd.f32 %v916, %v917
        %v919 = vsel %vm897, %v892, 0.0
        %v920 = vrot.slane %v919, 4
        %v921 = vadd.f32 %v919, %v920
        %v922 = vrot.slane %v921, 2
        %v923 = vadd.f32 %v921, %v922
        %v924 = vrot.slane %v923, 1
        %v925 = vadd.f32 %v923, %v924
        %v926 = vsel %vm897, %v893, 0.0
        %v927 = vrot.slane %v926, 4
        %v928 = vadd.f32 %v926, %v927
        %v929 = vrot.slane %v928, 2
        %v930 = vadd.f32 %v928, %v929
        %v931 = vrot.slane %v930, 1
        %v932 = vadd.f32 %v930, %v931
        %v933 = vsel %vm897, %v894, 0.0
        %v934 = vrot.slane %v933, 4
        %v935 = vadd.f32 %v933, %v934
        %v936 = vrot.slane %v935, 2
        %v937 = vadd.f32 %v935, %v936
        %v938 = vrot.slane %v937, 1
        %v939 = vadd.f32 %v937, %v938
        %v940 = vsel %vm897, %v895, 0.0
        %v941 = vrot.slane %v940, 4
        %v942 = vadd.f32 %v940, %v941
        %v943 = vrot.slane %v942, 2
        %v944 = vadd.f32 %v942, %v943
        %v945 = vrot.slane %v944, 1
        %v946 = vadd.f32 %v944, %v945
        %v947 = vsel %vm897, %v896, 0.0
        %v948 = vrot.slane %v947, 4
        %v949 = vadd.f32 %v947, %v948
        %v950 = vrot.slane %v949, 2
        %v951 = vadd.f32 %v949, %v950
        %v952 = vrot.slane %v951, 1
        %v953 = vadd.f32 %v951, %v952
        %v954 = vld [vmem:[#allocation14] sm:$0xff]
        %v955 = vld [vmem:[#allocation14 + $0x8] sm:$0xff]
        %v956 = vld [vmem:[#allocation14 + $0x10] sm:$0xff]
        %v957 = vld [vmem:[#allocation14 + $0x18] sm:$0xff]
        %v958 = vld [vmem:[#allocation14 + $0x20] sm:$0xff]
        %v959 = vld [vmem:[#allocation14 + $0x28] sm:$0xff]
        %v960 = vld [vmem:[#allocation14 + $0x30] sm:$0xff]
        %v961 = vld [vmem:[#allocation14 + $0x38] sm:$0xff]
        %v962 = vld [vmem:[#allocation15] sm:$0xff]
        %v963 = vld [vmem:[#allocation15 + $0x8] sm:$0xff]
        %vm964 = vcmask 130048
        %v966 = vsel %vm964, %v800, 0
        %968 = vmatpush.msra.mxu0 0.0
        %969 = vmatpush.msra.mxu0 0.0
        %970 = vmatpush.msra.mxu0 0.0
        %971 = vmatpush.msra.mxu0 0.0
        %972 = vmatpush.msra.mxu0 0.0
        %973 = vmatpush.msra.mxu0 0.0
        %974 = vmatpush.msra.mxu0 0.0
        %975 = vmatpush.msra.mxu0 0.0
        %976 = vmatpush.msra.mxu0 0.0
        %977 = vmatpush.msra.mxu0 0.0
        %978 = vmatpush.msra.mxu0 0.0
        %979 = vmatpush.msra.mxu0 0.0
        %980 = vmatpush.msra.mxu0 0.0
        %981 = vmatpush.msra.mxu0 0.0
        %982 = vmatpush.msra.mxu0 %v963
        %983 = vmatpush.msra.mxu0 %v962
        %984 = vmatmul.f32.gmra.mxu0 %v966
        %v985 = vpop.f32.mrf.mxu0
        %v986 = vadd.f32 0.0, %v985
        %987 = vdwg.mxu0
        %vm996 = vcmask 1041409
        %v997 = vsel %vm996, %v911, %v904
        %vm998 = vcmask 1042434
        %v999 = vsel %vm998, %v918, %v997
        %vm1000 = vcmask 1043459
        %v1001 = vsel %vm1000, %v925, %v999
        %vm1002 = vcmask 1044484
        %v1003 = vsel %vm1002, %v932, %v1001
        %vm1004 = vcmask 1045509
        %v1005 = vsel %vm1004, %v939, %v1003
        %vm1006 = vcmask 1046534
        %v1007 = vsel %vm1006, %v946, %v1005
        %vm1008 = vcmask 1047559
        %v1009 = vsel %vm1008, %v953, %v1007
        %v1010 = vsel %vm897, %v1009, 0
        %1012 = vmatpush.msra.mxu0 0.0
        %1013 = vmatpush.msra.mxu0 0.0
        %1014 = vmatpush.msra.mxu0 0.0
        %1015 = vmatpush.msra.mxu0 0.0
        %1016 = vmatpush.msra.mxu0 0.0
        %1017 = vmatpush.msra.mxu0 0.0
        %1018 = vmatpush.msra.mxu0 0.0
        %1019 = vmatpush.msra.mxu0 0.0
        %1020 = vmatpush.msra.mxu0 %v961
        %1021 = vmatpush.msra.mxu0 %v960
        %1022 = vmatpush.msra.mxu0 %v959
        %1023 = vmatpush.msra.mxu0 %v958
        %1024 = vmatpush.msra.mxu0 %v957
        %1025 = vmatpush.msra.mxu0 %v956
        %1026 = vmatpush.msra.mxu0 %v955
        %1027 = vmatpush.msra.mxu0 %v954
        %1028 = vmatmul.f32.gmra.mxu0 %v1010
        %v1029 = vpop.f32.mrf.mxu0
        %v1030 = vadd.f32 %v986, %v1029
        %1031 = vdwg.mxu0
        %v1032 = vld [vmem:[#allocation17] sm:$0xff]
        %v1033 = vld [vmem:[#allocation17 + $0x8] sm:$0xff]
        %v1034 = vld [vmem:[#allocation17 + $0x10] sm:$0xff]
        %v1035 = vld [vmem:[#allocation17 + $0x18] sm:$0xff]
        %v1037 = vsel %vm806, %v798, 0
        %1039 = vmatpush.msra.mxu0 0.0
        %1040 = vmatpush.msra.mxu0 0.0
        %1041 = vmatpush.msra.mxu0 0.0
        %1042 = vmatpush.msra.mxu0 0.0
        %1043 = vmatpush.msra.mxu0 0.0
        %1044 = vmatpush.msra.mxu0 0.0
        %1045 = vmatpush.msra.mxu0 0.0
        %1046 = vmatpush.msra.mxu0 0.0
        %1047 = vmatpush.msra.mxu0 0.0
        %1048 = vmatpush.msra.mxu0 0.0
        %1049 = vmatpush.msra.mxu0 0.0
        %1050 = vmatpush.msra.mxu0 0.0
        %1051 = vmatpush.msra.mxu0 %v1035
        %1052 = vmatpush.msra.mxu0 %v1034
        %1053 = vmatpush.msra.mxu0 %v1033
        %1054 = vmatpush.msra.mxu0 %v1032
        %1055 = vmatmul.f32.gmra.mxu0 %v1037
        %v1056 = vpop.f32.mrf.mxu0
        %v1057 = vadd.f32 0.0, %v1056
        %1058 = vdwg.mxu0
        %v1059 = vadd.f32 %v1030, %v1057
        %v1060 = vld [vmem:[%s10] sm:$0x1]
        %v1062 = vperm.slane %v1060, 0
        %v1064 = vadd.f32 %v1059, %v1062
        %v1065 = vlaneseq
        %v1066 = vand.u32 %v1065, 127
        %vm1067 = vcmp.lt.s32.totalorder %v1066, 96
        %v1068 = vxor.u32 %v1064, 2147483648
        %v1069 = vmul.f32 %v1068, 1.442695
        %v1070 = vpow.pop %v1069
        %v1071 = vadd.f32 %v1070, 1.0
        %v1072 = vrcp.pop %v1071
        %v1073 = vmul.f32 %v1071, %v1072
        %v1074 = vsub.f32 1.0, %v1073
        %v1075 = vmul.f32 %v1072, %v1074
        %v1076 = vadd.f32 %v1072, %v1075
        %vm1077 = vweird.f32 %v1071
        %vm1078 = vweird.f32 %v1072
        %vm1079 = vmor %vm1077, %vm1078
        %v1080 = vsel %vm1079, %v1072, %v1076
        %v1081 = vand.u32 2147483647, %v1071
        %vm1082 = vcmp.eq.f32.partialorder %v1081, 8.507059e+37
        %v1083 = vand.u32 %v1071, 2147483648
        %v1084 = vor.u32 1.1754944e-38, %v1083
        %v1085 = vsel %vm1082, %v1084, %v1080
        %v1086 = vmul.f32 1.0, %v1085
        %v1087 = vtanh.pop %v1064
        %v1088 = vsel %vm1067, %v1086, %v1087
        %1090 = vrot.lane.b32.xlu0 %v799, 32
        %v1091 = vpop.permute.xlu0 %1090
        %v1093 = vmul.f32 %v1088, %v1091
        %1095 = vrot.lane.b32.xlu0 %v1088, 32
        %v1096 = vpop.permute.xlu0 %1095
        %v1098 = vmul.f32 %v1088, %v1096
        %1100 = vrot.lane.b32.xlu0 %v1098, 32
        %v1101 = vpop.permute.xlu0 %1100
        %v1103 = vadd.f32 %v1093, %v1101
        %v1104 = vtanh.pop %v1103
        %1106 = vrot.lane.b32.xlu0 %v1104, 32
        %v1107 = vpop.permute.xlu0 %1106
        %v1109 = vmul.f32 %v1088, %v1107
        %1111 = vrot.lane.b32.xlu0 %v1109, 64
        %v1112 = vpop.permute.xlu0 %1111
        %1114 = vst.msk [vmem:[#allocation2] sm:$0xff] %vm806, %v1112
        %1116 = vrot.lane.b32.xlu0 %v1103, 96
        %v1117 = vpop.permute.xlu0 %1116
        %1119 = vst.msk [vmem:[#allocation3] sm:$0xff] %vm806, %v1117
        %v1120 = vld [vmem:[#allocation18] sm:$0xff]
        %v1121 = vld [vmem:[#allocation18 + $0x8] sm:$0xff]
        %v1122 = vld [vmem:[#allocation18 + $0x10] sm:$0xff]
        %v1123 = vld [vmem:[#allocation18 + $0x18] sm:$0xff]
        %v1124 = vld [vmem:[%s12] sm:$0x1]
        %v1126 = vperm.slane %v1124, 0
        %v1128 = vsel %vm806, %v1112, 0
        %1130 = vmatpush.msra.mxu0 0.0
        %1131 = vmatpush.msra.mxu0 0.0
        %1132 = vmatpush.msra.mxu0 0.0
        %1133 = vmatpush.msra.mxu0 0.0
        %1134 = vmatpush.msra.mxu0 0.0
        %1135 = vmatpush.msra.mxu0 0.0
        %1136 = vmatpush.msra.mxu0 0.0
        %1137 = vmatpush.msra.mxu0 0.0
        %1138 = vmatpush.msra.mxu0 0.0
        %1139 = vmatpush.msra.mxu0 0.0
        %1140 = vmatpush.msra.mxu0 0.0
        %1141 = vmatpush.msra.mxu0 0.0
        %1142 = vmatpush.msra.mxu0 %v1123
        %1143 = vmatpush.msra.mxu0 %v1122
        %1144 = vmatpush.msra.mxu0 %v1121
        %1145 = vmatpush.msra.mxu0 %v1120
        %1146 = vmatmul.f32.gmra.mxu0 %v1128
        %v1147 = vpop.f32.mrf.mxu0
        %v1148 = vadd.f32 %v1126, %v1147
        %1149 = vdwg.mxu0
        %1150 = vst [vmem:[%s690] sm:$0xff] %v1148
        // Predicated region
        $region109: #{tpu_custom_call.1} parent=71 // pred_check
          %p1151 = pneg %p699
        $region110: #{tpu_custom_call.1} parent=71 // pred_check_branch
          %1153 = sbr.rel (%p1151) target = $region112
        $region111: #{tpu_custom_call.1} parent=71 // pred_region
          %1154 = vst.msk [vmem:[%s697] sm:$0xff] %vm806, %v1112
          %s1155 = scalar_lea.vmem %s697, 8 [#allocation21]
          %1156 = vst.msk [vmem:[%s1155] sm:$0xff] %vm806, %v1117
        $region112: #{tpu_custom_call.1} parent=71 // pred_fallthru
          _
        %s1157 = sand.u32 %s361, 1
        %s1158 = scalar_lea.sflag [#allocation8], %s1157
        %s1159 = sand.u32 %s361, 1
        %s1160 = smul.addr %s1159, 8
        %s1161 = scalar_lea.vmem [#allocation20], %s1160
        %s1162 = sand.u32 %s387, 1
        %s1163 = scalar_lea.sflag [#allocation22], %s1162
        %s1164 = sand.u32 %s387, 1
        %s1165 = smul.addr %s1164, 16
        %s1166 = scalar_lea.vmem [#allocation21], %s1165
        // Predicated region
        $region113: #{tpu_custom_call.1} parent=71 // pred_check
          %p1167 = pneg %p371
        $region114: #{tpu_custom_call.1} parent=71 // pred_check_branch
          %1169 = sbr.rel (%p1167) target = $region116
        $region115: #{tpu_custom_call.1} parent=71 // pred_region
          %1171 = vsyncadd %s1158, 0
          %s1172 = smul.addr %s49, 2
          %s1173 = sadd.s32 %s48, %s1172
          %s1174 = smul.addr %s1173, 8
          %s1175 = scalar_lea.hbm %s13, %s1174
          %s1177 = sshll.u32 %s1161, 4
          %s1178 = int_to_ptr.vmem [resolvable:$true] %s1177
          %s1179 = sshll.u32 %s1175, 4
          %s1180 = int_to_ptr.hbm [resolvable:$true] %s1179
          %1182 = dma.vmem_to_hbm [thread:$0]  %s1178, 128, %s1180, %s1158
        $region116: #{tpu_custom_call.1} parent=71 // pred_fallthru
          _
        // Predicated region
        $region117: #{tpu_custom_call.1} parent=71 // pred_check
          %p1183 = pneg %p397
        $region118: #{tpu_custom_call.1} parent=71 // pred_check_branch
          %1185 = sbr.rel (%p1183) target = $region120
        $region119: #{tpu_custom_call.1} parent=71 // pred_region
          %1187 = vsyncadd %s1163, 0
          %s1188 = smul.addr %s48, 8
          %s1189 = scalar_lea.hbm %s14, %s1188
          %s1190 = sshll.u32 %s1166, 4
          %s1191 = int_to_ptr.vmem [resolvable:$true] %s1190
          %s1192 = sshll.u32 %s1189, 4
          %s1193 = int_to_ptr.hbm [resolvable:$true] %s1192
          %1198 = dma.vmem_to_hbm [thread:$0]  %s1191, 256, %s1193, %s1163, 128, 256, 8
        $region120: #{tpu_custom_call.1} parent=71 // pred_fallthru
          _
      $region72: #{tpu_custom_call.1} parent=5 // pred_fallthru
        _
      %p1199 = scmp.le.s32.totalorder 2, %s39
      // Predicated region
      $region121: #{tpu_custom_call.1} parent=5 // pred_check
        %p1200 = pneg %p1199
      $region122: #{tpu_custom_call.1} parent=5 // pred_check_branch
        %1202 = sbr.rel (%p1200) target = $region124
      $region123: #{tpu_custom_call.1} parent=5 // pred_region
        %s1203 = ssub.s32 %s39, 2
        // Predicated region
        $region125: #{tpu_custom_call.1} parent=123 // pred_check
          %p1204 = pneg %p377
        $region126: #{tpu_custom_call.1} parent=123 // pred_check_branch
          %1206 = sbr.rel (%p1204) target = $region128
        $region127: #{tpu_custom_call.1} parent=123 // pred_region
          %s1207 = sand.u32 %s362, 1
          %s1208 = scalar_lea.sflag [#allocation8], %s1207
          %s1209 = sand.u32 %s362, 1
          %s1210 = smul.addr %s1209, 8
          %s1211 = scalar_lea.vmem [#allocation20], %s1210
          %1213 = dma.done %s1208, 128
        $region128: #{tpu_custom_call.1} parent=123 // pred_fallthru
          _
        // Predicated region
        $region129: #{tpu_custom_call.1} parent=123 // pred_check
          %p1214 = pneg %p403
        $region130: #{tpu_custom_call.1} parent=123 // pred_check_branch
          %1216 = sbr.rel (%p1214) target = $region132
        $region131: #{tpu_custom_call.1} parent=123 // pred_region
          %s1217 = sand.u32 %s388, 1
          %s1218 = scalar_lea.sflag [#allocation22], %s1217
          %s1219 = sand.u32 %s388, 1
          %s1220 = smul.addr %s1219, 16
          %s1221 = scalar_lea.vmem [#allocation21], %s1220
          %1223 = dma.done %s1218, 256
        $region132: #{tpu_custom_call.1} parent=123 // pred_fallthru
          _
      $region124: #{tpu_custom_call.1} parent=5 // pred_fallthru
        _
    $region6: #{tpu_custom_call.1} parent=1 // loop_footer
      %s43 = sadd.s32 1, %s39
    $region7: #{tpu_custom_call.1} parent=1 // loop_footer_branch
      %38 = sbr.rel target = $region3
    $region8: #{tpu_custom_call.1} parent=1 // loop_exit
      _
    %1224 = vsyncpa [#allocation7], 1
    %s1225 = scalar_lea.sflag [#allocation7], 1
    %1226 = vsyncpa %s1225, 1
    %1227 = vsyncpa [#allocation10], 1
    %s1228 = scalar_lea.sflag [#allocation10], 1
    %1229 = vsyncpa %s1228, 1
    %1230 = vsyncpa [#allocation13], 1
    %s1231 = scalar_lea.sflag [#allocation13], 1
    %1232 = vsyncpa %s1231, 1
    %1233 = vsyncpa [#allocation16], 1
    %1234 = vsyncpa [#allocation19], 1
    %1235 = vsyncpa [#allocation8], 1
    %s1236 = scalar_lea.sflag [#allocation8], 1
    %1237 = vsyncpa %s1236, 1
    %1238 = vsyncpa [#allocation22], 1
    %s1239 = scalar_lea.sflag [#allocation22], 1
    %1240 = vsyncpa %s1239, 1

</llo_original>
